<compile_context>
chip_gen: v6e
topology: v6e:2x2x1
jax: 0.10.0
libtpu: 0.0.40
codegen_flags: <defaults>
</compile_context>

<pallas_src>
from typing import NamedTuple, Optional

import jax
import jax.numpy as jnp
from jax.experimental import pallas as pl
from jax.experimental.pallas import tpu as pltpu

_LANE = 128


def _round_up(n, m):
    return ((n + m - 1) // m) * m


def _cdiv(a, b):
    return -(-a // b)


# ---------------------------------------------------------------------------
# Hardware / feature queries (generation-aware tiling and VMEM budgets).
# ---------------------------------------------------------------------------

def _tpu_generation_info():
    """(vmem_capacity_bytes, tensorcores_per_chip) with conservative fallbacks."""
    vmem_cap = 64 << 20          # conservative fallback (v7x-sized)
    num_tc = 1
    try:
        vmem_cap = int(pltpu.get_tpu_info().vmem_capacity_bytes)
    except Exception:
        pass
    try:
        kind = jax.devices()[0].device_kind.lower()
        if "v7" in kind:
            num_tc = 2
    except Exception:
        pass
    if vmem_cap <= (64 << 20):
        num_tc = max(num_tc, 2)  # 64 MiB/TensorCore => v7x-class part
    return vmem_cap, num_tc


_SINGLE_BUFFER_OK = None


def _probe_single_buffer():
    """Probe (eagerly, once) whether pipeline_mode=pl.Buffered(1) lowers here.

    Single-buffering the stationary weight/bias blocks reclaims VMEM so the
    row tiles can stay large (matters most under v7x's 64 MiB VMEM).
    """
    try:
        w_spec = pl.BlockSpec((8, _LANE), lambda i: (0, 0),
                              pipeline_mode=pl.Buffered(1))
        x_spec = pl.BlockSpec((8, _LANE), lambda i: (i, 0))

        def _k(x_ref, w_ref, o_ref):
            o_ref[...] = x_ref[...] + w_ref[...]

        f = pl.pallas_call(
            _k,
            out_shape=jax.ShapeDtypeStruct((16, _LANE), jnp.float32),
            grid=(2,),
            in_specs=[x_spec, w_spec],
            out_specs=pl.BlockSpec((8, _LANE), lambda i: (i, 0)),
        )
        jax.block_until_ready(f(jnp.zeros((16, _LANE), jnp.float32),
                                jnp.zeros((8, _LANE), jnp.float32)))
        return True
    except Exception:
        return False


def _single_buffer_supported():
    global _SINGLE_BUFFER_OK
    if _SINGLE_BUFFER_OK is None:
        _SINGLE_BUFFER_OK = _probe_single_buffer()
    return _SINGLE_BUFFER_OK


# ---------------------------------------------------------------------------
# Parameter preparation (hoisted out of the per-call path and cached).
# ---------------------------------------------------------------------------

class PreparedParams(NamedTuple):
    w1: jax.Array            # (d or round_up(d, tk), hp)  bf16
    b1: jax.Array            # (1, hp)  f32
    w2: jax.Array            # (hp, ep) bf16
    b2: jax.Array            # (1, ep)  f32
    d: int                   # logical flattened input dim
    h: int                   # logical hidden dim
    e: int                   # logical embedding dim
    tk: Optional[int]        # None -> resident-weight path; else K-tile width
    vmem_cap: int
    num_tc: int
    weights_single_buffer: bool


def prepare_params(params, *, force_k_tiled=False, k_tile=512):
    """Pad HIDDEN/EMBED to lane-dense widths (128), cast weights to bf16, pick
    the execution path.  Call ONCE (outside jit) and reuse the result."""
    w1, b1, w2, b2 = params
    d, h = int(w1.shape[0]), int(w1.shape[1])
    e = int(w2.shape[1])
    hp, ep = _round_up(h, _LANE), _round_up(e, _LANE)

    vmem_cap, num_tc = _tpu_generation_info()
    budget = int(vmem_cap * 0.75)

    # Resident path keeps w1 fully in VMEM; needs room for row-tile buffers too.
    resident_w_bytes = d * hp * 2 + hp * ep * 2 + (hp + ep) * 4
    min_tile_bytes = 3 * (2 * 8 * d * 4 + 2 * 8 * ep * 2)
    use_k_tiled = force_k_tiled or (resident_w_bytes + min_tile_bytes > budget)

    if use_k_tiled:
        tk = min(_round_up(int(k_tile), _LANE), _round_up(d, _LANE))
        dp = _round_up(d, tk)    # zero-pad w1's D so every streamed K block is full
    else:
        tk = None
        dp = d                   # full-dim block: no D padding needed

    w1p = jnp.zeros((dp, hp), jnp.bfloat16).at[:d, :h].set(w1.astype(jnp.bfloat16))
    b1p = jnp.zeros((1, hp), jnp.float32).at[:, :h].set(
        jnp.asarray(b1, jnp.float32).reshape(1, h))
    w2p = jnp.zeros((hp, ep), jnp.bfloat16).at[:h, :e].set(w2.astype(jnp.bfloat16))
    b2p = jnp.zeros((1, ep), jnp.float32).at[:, :e].set(
        jnp.asarray(b2, jnp.float32).reshape(1, e))

    return PreparedParams(w1p, b1p, w2p, b2p, d, h, e, tk, vmem_cap, num_tc,
                          _single_buffer_supported())


def _const_spec_kw(prep):
    """Single-buffer stationary (constant index_map) operands when supported."""
    return {"pipeline_mode": pl.Buffered(1)} if prep.weights_single_buffer else {}


def _pick_tm(n, per_row_bytes, fixed_bytes, vmem_budget, num_tc, max_rows):
    """Largest row tile that fits the VMEM budget; split across TensorCores."""
    avail = max(vmem_budget - fixed_bytes, 8 * per_row_bytes)
    tm = (avail // per_row_bytes) // 8 * 8
    tm = max(8, min(int(max_rows), int(tm)))
    if num_tc >= 2 and n > 8:
        # Guarantee >=2 grid steps so the "parallel" batch axis spans both cores.
        tm = min(tm, _round_up(_cdiv(n, num_tc), 8))
    if n <= tm:
        return n                 # single block; full row extent is always legal
    return max(8, (tm // 8) * 8)


# ---------------------------------------------------------------------------
# Path 1: resident weights (w1 fully in VMEM) -- the common case.
# ---------------------------------------------------------------------------

def _resident_mlp_kernel(*refs):
    """refs = (x_0..x_{k-1}, w1, b1, w2, b2, o_0..o_{k-1}).

    x tiles arrive in the caller's dtype (f32) and are cast to bf16 in-kernel
    (VPU, free filler) right before the MXU matmuls; accumulation is f32."""
    k = (len(refs) - 4) // 2
    x_refs = refs[:k]
    w1_ref, b1_ref, w2_ref, b2_ref = refs[k:k + 4]
    o_refs = refs[k + 4:]

    w1 = w1_ref[...]
    b1 = b1_ref[...]
    w2 = w2_ref[...]
    b2 = b2_ref[...]
    for x_ref, o_ref in zip(x_refs, o_refs):
        x = x_ref[...].astype(jnp.bfloat16)
        h = jnp.dot(x, w1, preferred_element_type=jnp.float32)
        h = jnp.maximum(h + b1, 0.0)                              # bias + ReLU (f32)
        y = jnp.dot(h.astype(jnp.bfloat16), w2, preferred_element_type=jnp.float32)
        o_ref[...] = (y + b2).astype(o_ref.dtype)                 # bf16 store


def _mlp_resident(xs, prep, *, max_rows=None):
    k = len(xs)
    n, d = xs[0].shape
    hp = prep.w1.shape[1]
    ep = prep.w2.shape[1]
    x_bpe = xs[0].dtype.itemsize
    budget = int(prep.vmem_cap * 0.75)
    if max_rows is None:
        max_rows = 1024 if prep.vmem_cap > (96 << 20) else 512

    w_bytes = d * hp * 2 + hp * ep * 2 + (hp + ep) * 4            # single-buffered
    per_row = k * (2 * d * x_bpe + 2 * ep * 2 + (hp + ep) * 4)    # x/out bufs + temps
    tm = _pick_tm(n, per_row, w_bytes, budget, prep.num_tc, max_rows)
    grid = (pl.cdiv(n, tm),)

    res_kw = _const_spec_kw(prep)
    x_spec = pl.BlockSpec((tm, d), lambda i: (i, 0))
    o_spec = pl.BlockSpec((tm, ep), lambda i: (i, 0))
    w1_spec = pl.BlockSpec((d, hp), lambda i: (0, 0), **res_kw)
    b1_spec = pl.BlockSpec((1, hp), lambda i: (0, 0), **res_kw)
    w2_spec = pl.BlockSpec((hp, ep), lambda i: (0, 0), **res_kw)
    b2_spec = pl.BlockSpec((1, ep), lambda i: (0, 0), **res_kw)

    flops = 2 * k * n * (d * hp + hp * ep)
    bytes_accessed = (k * n * d * x_bpe + d * hp * 2 + hp * ep * 2
                      + (hp + ep) * 4 + k * n * ep * 2)
    cost = pl.CostEstimate(flops=flops, transcendentals=0,
                           bytes_accessed=bytes_accessed)

    needed = w_bytes + tm * per_row
    vmem_limit = int(min(budget, max(32 << 20, int(needed * 1.25))))

    out_shape = tuple(jax.ShapeDtypeStruct((n, ep), jnp.bfloat16) for _ in range(k))
    outs = pl.pallas_call(
        _resident_mlp_kernel,
        out_shape=out_shape,
        grid=grid,
        in_specs=[x_spec] * k + [w1_spec, b1_spec, w2_spec, b2_spec],
        out_specs=tuple(o_spec for _ in range(k)),
        compiler_params=pltpu.CompilerParams(
            dimension_semantics=("parallel",),
            vmem_limit_bytes=vmem_limit),
        cost_estimate=cost,
    )(*xs, prep.w1, prep.b1, prep.w2, prep.b2)
    if not isinstance(outs, (tuple, list)):
        outs = (outs,)
    return tuple(outs)


# ---------------------------------------------------------------------------
# Path 2: K-tiled (streamed w1) for large D / tight VMEM (esp. v7x 64 MiB).
# ---------------------------------------------------------------------------

def _mlp_ktiled(xs, prep, *, max_rows=None):
    k = len(xs)
    n, d = xs[0].shape
    dp, hp = prep.w1.shape
    ep = prep.w2.shape[1]
    tk = prep.tk
    nk = dp // tk
    x_bpe = xs[0].dtype.itemsize
    budget = int(prep.vmem_cap * 0.75)
    if max_rows is None:
        max_rows = 1024 if prep.vmem_cap > (96 << 20) else 512

    fixed = 2 * tk * hp * 2 + hp * ep * 2 + (hp + ep) * 4  # streamed w1 + resident w2/b
    per_row = k * (2 * tk * x_bpe + 2 * ep * 2 + hp * 4 + ep * 4)
    tm = _pick_tm(n, per_row, fixed, budget, prep.num_tc, max_rows)
    grid = (pl.cdiv(n, tm), nk)

    res_kw = _const_spec_kw(prep)
    x_spec = pl.BlockSpec((tm, tk), lambda i, kk: (i, kk))
    w1_spec = pl.BlockSpec((tk, hp), lambda i, kk: (kk, 0))
    b1_spec = pl.BlockSpec((1, hp), lambda i, kk: (0, 0), **res_kw)
    w2_spec = pl.BlockSpec((hp, ep), lambda i, kk: (0, 0), **res_kw)
    b2_spec = pl.BlockSpec((1, ep), lambda i, kk: (0, 0), **res_kw)
    o_spec = pl.BlockSpec((tm, ep), lambda i, kk: (i, 0))

    needs_mask = (d % tk) != 0   # trailing partial K block of x carries garbage cols

    def kernel(*refs):
        x_refs = refs[:k]
        w1_ref, b1_ref, w2_ref, b2_ref = refs[k:k + 4]
        o_refs = refs[k + 4:k + 4 + k]
        acc_refs = refs[k + 4 + k:]
        kk = pl.program_id(1)

        @pl.when(kk == 0)
        def _():
            for acc in acc_refs:
                acc[...] = jnp.zeros_like(acc)

        w1 = w1_ref[...]
        if needs_mask:
            cols = kk * tk + jax.lax.broadcasted_iota(jnp.int32, (tm, tk), 1)
            in_bounds = cols < d
        for x_ref, acc in zip(x_refs, acc_refs):
            x = x_ref[...]
            if needs_mask:
                x = jnp.where(in_bounds, x, 0.0)
            acc[...] += jnp.dot(x.astype(jnp.bfloat16), w1,
                                preferred_element_type=jnp.float32)

        @pl.when(kk == pl.num_programs(1) - 1)
        def _():
            b1 = b1_ref[...]
            w2 = w2_ref[...]
            b2 = b2_ref[...]
            for acc, o_ref in zip(acc_refs, o_refs):
                hv = jnp.maximum(acc[...] + b1, 0.0).astype(jnp.bfloat16)
                y = jnp.dot(hv, w2, preferred_element_type=jnp.float32)
                o_ref[...] = (y + b2).astype(o_ref.dtype)

    flops = 2 * k * n * (d * hp + hp * ep)
    bytes_accessed = (k * n * d * x_bpe + _cdiv(n, tm) * dp * hp * 2
                      + hp * ep * 2 + (hp + ep) * 4 + k * n * ep * 2)
    cost = pl.CostEstimate(flops=flops, transcendentals=0,
                           bytes_accessed=bytes_accessed)

    needed = fixed + tm * per_row
    vmem_limit = int(min(budget, max(32 << 20, int(needed * 1.25))))

    out_shape = tuple(jax.ShapeDtypeStruct((n, ep), jnp.bfloat16) for _ in range(k))
    outs = pl.pallas_call(
        kernel,
        out_shape=out_shape,
        grid=grid,
        in_specs=[x_spec] * k + [w1_spec, b1_spec, w2_spec, b2_spec],
        out_specs=tuple(o_spec for _ in range(k)),
        scratch_shapes=[pltpu.VMEM((tm, hp), jnp.float32) for _ in range(k)],
        compiler_params=pltpu.CompilerParams(
            dimension_semantics=("parallel", "arbitrary"),
            vmem_limit_bytes=vmem_limit),
        cost_estimate=cost,
    )(*xs, prep.w1, prep.b1, prep.w2, prep.b2)
    if not isinstance(outs, (tuple, list)):
        outs = (outs,)
    return tuple(outs)


def _shared_mlp(xs, prep, *, max_rows=None):
    if prep.tk is None:
        return _mlp_resident(xs, prep, max_rows=max_rows)
    return _mlp_ktiled(xs, prep, max_rows=max_rows)


# ---------------------------------------------------------------------------
# Public API mirroring the PyTorch module.
# ---------------------------------------------------------------------------

def triplet_net_forward(x1, x2, x3, prep, *, out_dtype=jnp.float32, max_rows=None):
    """TripletNet.forward: shared embedding_net applied to x1, x2, x3."""
    xs = [x.reshape(x.shape[0], -1) for x in (x1, x2, x3)]  # metadata-only flatten
    o1, o2, o3 = _shared_mlp(xs, prep, max_rows=max_rows)
    e = prep.e
    return (o1[:, :e].astype(out_dtype),
            o2[:, :e].astype(out_dtype),
            o3[:, :e].astype(out_dtype))


def get_embedding(x, prep, *, out_dtype=jnp.float32, max_rows=None):
    """TripletNet.get_embedding."""
    (o,) = _shared_mlp([x.reshape(x.shape[0], -1)], prep, max_rows=max_rows)
    return o[:, :prep.e].astype(out_dtype)


def init_params(key, in_dim, hidden_dim, embed_dim):
    k1, k2, k3, k4 = jax.random.split(key, 4)
    w1 = jax.random.normal(k1, (in_dim, hidden_dim), jnp.float32) * 0.02
    b1 = jax.random.normal(k2, (1, hidden_dim), jnp.float32) * 0.02
    w2 = jax.random.normal(k3, (hidden_dim, embed_dim), jnp.float32) * 0.02
    b2 = jax.random.normal(k4, (1, embed_dim), jnp.float32) * 0.02
    return (w1, b1, w2, b2)


if __name__ == "__main__":
    # Small shapes: batch=2, channels=4, spatial=16x16, hidden=32, embed=16.
    B, C, H, W = 2, 4, 16, 16
    HIDDEN, EMBED = 32, 16
    D = C * H * W

    key = jax.random.PRNGKey(0)
    kx1, kx2, kx3, kp = jax.random.split(key, 4)
    x1 = jax.random.normal(kx1, (B, C, H, W), jnp.float32)
    x2 = jax.random.normal(kx2, (B, C, H, W), jnp.float32)
    x3 = jax.random.normal(kx3, (B, C, H, W), jnp.float32)
    params = init_params(kp, D, HIDDEN, EMBED)

    def ref_embed(x, p):
        w1, b1, w2, b2 = p
        hdn = jnp.maximum(x.reshape(x.shape[0], -1) @ w1 + b1, 0.0)
        return hdn @ w2 + b2

    # Weight padding / bf16 cast hoisted out of the per-call path (cached prep).
    prep = prepare_params(params)
    fwd = jax.jit(lambda a, b, c: triplet_net_forward(a, b, c, prep))
    o1, o2, o3 = fwd(x1, x2, x3)
    jax.block_until_ready((o1, o2, o3))

    emb = jax.jit(lambda a: get_embedding(a, prep))(x1)
    jax.block_until_ready(emb)

    tol = dict(atol=2e-2, rtol=2e-2)   # bf16 MXU operands + bf16 store
    assert o1.shape == (B, EMBED) and o2.shape == (B, EMBED) and o3.shape == (B, EMBED)
    assert jnp.allclose(o1, ref_embed(x1, params), **tol)
    assert jnp.allclose(o2, ref_embed(x2, params), **tol)
    assert jnp.allclose(o3, ref_embed(x3, params), **tol)
    assert jnp.allclose(emb, ref_embed(x1, params), **tol)

    # Robustness checks (review): non-multiple batch (partial trailing row
    # block), non-128-multiple D, and the K-tiled (streamed-w1) path.
    B2, C2, H2, W2 = 10, 3, 15, 16       # D2 = 720: not a multiple of 128
    D2 = C2 * H2 * W2
    ky, kp2 = jax.random.split(jax.random.PRNGKey(1))
    y = jax.random.normal(ky, (B2, C2, H2, W2), jnp.float32)
    params2 = init_params(kp2, D2, HIDDEN, EMBED)
    ref2 = ref_embed(y, params2)

    prep2 = prepare_params(params2)
    emb2 = jax.jit(lambda a: get_embedding(a, prep2, max_rows=8))(y)
    jax.block_until_ready(emb2)
    assert jnp.allclose(emb2, ref2, **tol)

    prep2k = prepare_params(params2, force_k_tiled=True, k_tile=128)
    emb2k = jax.jit(lambda a: get_embedding(a, prep2k, max_rows=8))(y)
    jax.block_until_ready(emb2k)
    assert jnp.allclose(emb2k, ref2, **tol)

    print("KERNEL_OK")
</pallas_src>

<mosaic_0001>
module attributes {stable_mosaic.version = 11 : i64} {
  func.func @_k(%arg0: i32, %arg1: memref<8x128xf32, #tpu.memory_space<vmem>>, %arg2: memref<8x128xf32, #tpu.memory_space<vmem>>, %arg3: memref<8x128xf32, #tpu.memory_space<vmem>>) attributes {dimension_semantics = [#tpu.dimension_semantics<arbitrary>], iteration_bounds = array<i64: 2>, scalar_prefetch = 0 : i64, scratch_operands = 0 : i64, tpu.core_type = #tpu.core_type<tc>, window_params = [{transform_indices = @transform_0, window_bounds = array<i64: 8, 128>}, {pipeline_mode = #tpu.pipeline_mode<synchronous>, transform_indices = @transform_1, window_bounds = array<i64: 8, 128>}, {transform_indices = @transform_2, window_bounds = array<i64: 8, 128>}]} {
    %c0 = arith.constant 0 : index
    %c0_0 = arith.constant 0 : index
    %0 = vector.load %arg1[%c0, %c0_0] : memref<8x128xf32, #tpu.memory_space<vmem>>, vector<8x128xf32>
    %c0_1 = arith.constant 0 : index
    %c0_2 = arith.constant 0 : index
    %1 = vector.load %arg2[%c0_1, %c0_2] : memref<8x128xf32, #tpu.memory_space<vmem>>, vector<8x128xf32>
    %2 = arith.addf %0, %1 : vector<8x128xf32>
    %c0_3 = arith.constant 0 : index
    %c0_4 = arith.constant 0 : index
    %3 = vector.load %arg3[%c0_3, %c0_4] : memref<8x128xf32, #tpu.memory_space<vmem>>, vector<8x128xf32>
    tpu.vector_store %arg3[%c0_3, %c0_4], %2 {strides = array<i32>} : memref<8x128xf32, #tpu.memory_space<vmem>>, vector<8x128xf32>,
    return
  }
  func.func @transform_0(%arg0: i32) -> (i32, i32) {
    %c0_i32 = arith.constant 0 : i32
    %c0_i32_0 = arith.constant 0 : i32
    return %arg0, %c0_i32 : i32, i32
  }
  func.func @transform_1(%arg0: i32) -> (i32, i32) {
    %c0_i32 = arith.constant 0 : i32
    %c0_i32_0 = arith.constant 0 : i32
    %c0_i32_1 = arith.constant 0 : i32
    return %c0_i32, %c0_i32_0 : i32, i32
  }
  func.func @transform_2(%arg0: i32) -> (i32, i32) {
    %c0_i32 = arith.constant 0 : i32
    %c0_i32_0 = arith.constant 0 : i32
    return %arg0, %c0_i32 : i32, i32
  }
}

module attributes {stable_mosaic.version = 11 : i64} {
  func.func @_resident_mlp_kernel(%arg0: i32, %arg1: memref<2x1024xf32, #tpu.memory_space<vmem>>, %arg2: memref<2x1024xf32, #tpu.memory_space<vmem>>, %arg3: memref<2x1024xf32, #tpu.memory_space<vmem>>, %arg4: memref<1024x128xbf16, #tpu.memory_space<vmem>>, %arg5: memref<1x128xf32, #tpu.memory_space<vmem>>, %arg6: memref<128x128xbf16, #tpu.memory_space<vmem>>, %arg7: memref<1x128xf32, #tpu.memory_space<vmem>>, %arg8: memref<2x128xbf16, #tpu.memory_space<vmem>>, %arg9: memref<2x128xbf16, #tpu.memory_space<vmem>>, %arg10: memref<2x128xbf16, #tpu.memory_space<vmem>>) attributes {dimension_semantics = [#tpu.dimension_semantics<parallel>], iteration_bounds = array<i64: 1>, scalar_prefetch = 0 : i64, scratch_operands = 0 : i64, tpu.core_type = #tpu.core_type<tc>, window_params = [{transform_indices = @transform_0, window_bounds = array<i64: 2, 1024>}, {transform_indices = @transform_1, window_bounds = array<i64: 2, 1024>}, {transform_indices = @transform_2, window_bounds = array<i64: 2, 1024>}, {pipeline_mode = #tpu.pipeline_mode<synchronous>, transform_indices = @transform_3, window_bounds = array<i64: 1024, 128>}, {pipeline_mode = #tpu.pipeline_mode<synchronous>, transform_indices = @transform_4, window_bounds = array<i64: 1, 128>}, {pipeline_mode = #tpu.pipeline_mode<synchronous>, transform_indices = @transform_5, window_bounds = array<i64: 128, 128>}, {pipeline_mode = #tpu.pipeline_mode<synchronous>, transform_indices = @transform_6, window_bounds = array<i64: 1, 128>}, {transform_indices = @transform_7, window_bounds = array<i64: 2, 128>}, {transform_indices = @transform_8, window_bounds = array<i64: 2, 128>}, {transform_indices = @transform_9, window_bounds = array<i64: 2, 128>}]} {
    %c0 = arith.constant 0 : index
    %c0_0 = arith.constant 0 : index
    %0 = vector.load %arg4[%c0, %c0_0] : memref<1024x128xbf16, #tpu.memory_space<vmem>>, vector<1024x128xbf16>
    %c0_1 = arith.constant 0 : index
    %c0_2 = arith.constant 0 : index
    %1 = vector.load %arg5[%c0_1, %c0_2] : memref<1x128xf32, #tpu.memory_space<vmem>>, vector<1x128xf32>
    %c0_3 = arith.constant 0 : index
    %c0_4 = arith.constant 0 : index
    %2 = vector.load %arg6[%c0_3, %c0_4] : memref<128x128xbf16, #tpu.memory_space<vmem>>, vector<128x128xbf16>
    %c0_5 = arith.constant 0 : index
    %c0_6 = arith.constant 0 : index
    %3 = vector.load %arg7[%c0_5, %c0_6] : memref<1x128xf32, #tpu.memory_space<vmem>>, vector<1x128xf32>
    %c0_7 = arith.constant 0 : index
    %c0_8 = arith.constant 0 : index
    %4 = vector.load %arg1[%c0_7, %c0_8] : memref<2x1024xf32, #tpu.memory_space<vmem>>, vector<2x1024xf32>
    %5 = arith.truncf %4 : vector<2x1024xf32> to vector<2x1024xbf16>
    %cst = arith.constant dense<0.000000e+00> : vector<2x128xf32>
    %6 = tpu.matmul %5, %0, %cst {dimension_numbers = #tpu.dot_dimension_numbers<[1], [0], [0], [1], [0, 0, 1, 1], [], []>} : vector<2x1024xbf16>, vector<1024x128xbf16>, vector<2x128xf32> -> vector<2x128xf32>
    %7 = vector.broadcast %1 : vector<1x128xf32> to vector<2x128xf32>
    %8 = arith.addf %6, %7 : vector<2x128xf32>
    %cst_9 = arith.constant 0.000000e+00 : f32
    %9 = vector.broadcast %cst_9 : f32 to vector<2x128xf32>
    %10 = arith.maximumf %8, %9 : vector<2x128xf32>
    %11 = arith.truncf %10 : vector<2x128xf32> to vector<2x128xbf16>
    %cst_10 = arith.constant dense<0.000000e+00> : vector<2x128xf32>
    %12 = tpu.matmul %11, %2, %cst_10 {dimension_numbers = #tpu.dot_dimension_numbers<[1], [0], [0], [1], [0, 0, 1, 1], [], []>} : vector<2x128xbf16>, vector<128x128xbf16>, vector<2x128xf32> -> vector<2x128xf32>
    %13 = vector.broadcast %3 : vector<1x128xf32> to vector<2x128xf32>
    %14 = arith.addf %12, %13 : vector<2x128xf32>
    %15 = arith.truncf %14 : vector<2x128xf32> to vector<2x128xbf16>
    %c0_11 = arith.constant 0 : index
    %c0_12 = arith.constant 0 : index
    %16 = vector.load %arg8[%c0_11, %c0_12] : memref<2x128xbf16, #tpu.memory_space<vmem>>, vector<2x128xbf16>
    tpu.vector_store %arg8[%c0_11, %c0_12], %15 {strides = array<i32>} : memref<2x128xbf16, #tpu.memory_space<vmem>>, vector<2x128xbf16>,
    %c0_13 = arith.constant 0 : index
    %c0_14 = arith.constant 0 : index
    %17 = vector.load %arg2[%c0_13, %c0_14] : memref<2x1024xf32, #tpu.memory_space<vmem>>, vector<2x1024xf32>
    %18 = arith.truncf %17 : vector<2x1024xf32> to vector<2x1024xbf16>
    %cst_15 = arith.constant dense<0.000000e+00> : vector<2x128xf32>
    %19 = tpu.matmul %18, %0, %cst_15 {dimension_numbers = #tpu.dot_dimension_numbers<[1], [0], [0], [1], [0, 0, 1, 1], [], []>} : vector<2x1024xbf16>, vector<1024x128xbf16>, vector<2x128xf32> -> vector<2x128xf32>
    %20 = vector.broadcast %1 : vector<1x128xf32> to vector<2x128xf32>
    %21 = arith.addf %19, %20 : vector<2x128xf32>
    %cst_16 = arith.constant 0.000000e+00 : f32
    %22 = vector.broadcast %cst_16 : f32 to vector<2x128xf32>
    %23 = arith.maximumf %21, %22 : vector<2x128xf32>
    %24 = arith.truncf %23 : vector<2x128xf32> to vector<2x128xbf16>
    %cst_17 = arith.constant dense<0.000000e+00> : vector<2x128xf32>
    %25 = tpu.matmul %24, %2, %cst_17 {dimension_numbers = #tpu.dot_dimension_numbers<[1], [0], [0], [1], [0, 0, 1, 1], [], []>} : vector<2x128xbf16>, vector<128x128xbf16>, vector<2x128xf32> -> vector<2x128xf32>
    %26 = vector.broadcast %3 : vector<1x128xf32> to vector<2x128xf32>
    %27 = arith.addf %25, %26 : vector<2x128xf32>
    %28 = arith.truncf %27 : vector<2x128xf32> to vector<2x128xbf16>
    %c0_18 = arith.constant 0 : index
    %c0_19 = arith.constant 0 : index
    %29 = vector.load %arg9[%c0_18, %c0_19] : memref<2x128xbf16, #tpu.memory_space<vmem>>, vector<2x128xbf16>
    tpu.vector_store %arg9[%c0_18, %c0_19], %28 {strides = array<i32>} : memref<2x128xbf16, #tpu.memory_space<vmem>>, vector<2x128xbf16>,
    %c0_20 = arith.constant 0 : index
    %c0_21 = arith.constant 0 : index
    %30 = vector.load %arg3[%c0_20, %c0_21] : memref<2x1024xf32, #tpu.memory_space<vmem>>, vector<2x1024xf32>
    %31 = arith.truncf %30 : vector<2x1024xf32> to vector<2x1024xbf16>
    %cst_22 = arith.constant dense<0.000000e+00> : vector<2x128xf32>
    %32 = tpu.matmul %31, %0, %cst_22 {dimension_numbers = #tpu.dot_dimension_numbers<[1], [0], [0], [1], [0, 0, 1, 1], [], []>} : vector<2x1024xbf16>, vector<1024x128xbf16>, vector<2x128xf32> -> vector<2x128xf32>
    %33 = vector.broadcast %1 : vector<1x128xf32> to vector<2x128xf32>
    %34 = arith.addf %32, %33 : vector<2x128xf32>
    %cst_23 = arith.constant 0.000000e+00 : f32
    %35 = vector.broadcast %cst_23 : f32 to vector<2x128xf32>
    %36 = arith.maximumf %34, %35 : vector<2x128xf32>
    %37 = arith.truncf %36 : vector<2x128xf32> to vector<2x128xbf16>
    %cst_24 = arith.constant dense<0.000000e+00> : vector<2x128xf32>
    %38 = tpu.matmul %37, %2, %cst_24 {dimension_numbers = #tpu.dot_dimension_numbers<[1], [0], [0], [1], [0, 0, 1, 1], [], []>} : vector<2x128xbf16>, vector<128x128xbf16>, vector<2x128xf32> -> vector<2x128xf32>
    %39 = vector.broadcast %3 : vector<1x128xf32> to vector<2x128xf32>
    %40 = arith.addf %38, %39 : vector<2x128xf32>
    %41 = arith.truncf %40 : vector<2x128xf32> to vector<2x128xbf16>
    %c0_25 = arith.constant 0 : index
    %c0_26 = arith.constant 0 : index
    %42 = vector.load %arg10[%c0_25, %c0_26] : memref<2x128xbf16, #tpu.memory_space<vmem>>, vector<2x128xbf16>
    tpu.vector_store %arg10[%c0_25, %c0_26], %41 {strides = array<i32>} : memref<2x128xbf16, #tpu.memory_space<vmem>>, vector<2x128xbf16>,
    return
  }
  func.func @transform_0(%arg0: i32) -> (i32, i32) {
    %c0_i32 = arith.constant 0 : i32
    %c0_i32_0 = arith.constant 0 : i32
    return %arg0, %c0_i32 : i32, i32
  }
  func.func @transform_1(%arg0: i32) -> (i32, i32) {
    %c0_i32 = arith.constant 0 : i32
    %c0_i32_0 = arith.constant 0 : i32
    return %arg0, %c0_i32 : i32, i32
  }
  func.func @transform_2(%arg0: i32) -> (i32, i32) {
    %c0_i32 = arith.constant 0 : i32
    %c0_i32_0 = arith.constant 0 : i32
    return %arg0, %c0_i32 : i32, i32
  }
  func.func @transform_3(%arg0: i32) -> (i32, i32) {
    %c0_i32 = arith.constant 0 : i32
    %c0_i32_0 = arith.constant 0 : i32
    %c0_i32_1 = arith.constant 0 : i32
    return %c0_i32, %c0_i32_0 : i32, i32
  }
  func.func @transform_4(%arg0: i32) -> (i32, i32) {
    %c0_i32 = arith.constant 0 : i32
    %c0_i32_0 = arith.constant 0 : i32
    %c0_i32_1 = arith.constant 0 : i32
    return %c0_i32, %c0_i32_0 : i32, i32
  }
  func.func @transform_5(%arg0: i32) -> (i32, i32) {
    %c0_i32 = arith.constant 0 : i32
    %c0_i32_0 = arith.constant 0 : i32
    %c0_i32_1 = arith.constant 0 : i32
    return %c0_i32, %c0_i32_0 : i32, i32
  }
  func.func @transform_6(%arg0: i32) -> (i32, i32) {
    %c0_i32 = arith.constant 0 : i32
    %c0_i32_0 = arith.constant 0 : i32
    %c0_i32_1 = arith.constant 0 : i32
    return %c0_i32, %c0_i32_0 : i32, i32
  }
  func.func @transform_7(%arg0: i32) -> (i32, i32) {
    %c0_i32 = arith.constant 0 : i32
    %c0_i32_0 = arith.constant 0 : i32
    return %arg0, %c0_i32 : i32, i32
  }
  func.func @transform_8(%arg0: i32) -> (i32, i32) {
    %c0_i32 = arith.constant 0 : i32
    %c0_i32_0 = arith.constant 0 : i32
    return %arg0, %c0_i32 : i32, i32
  }
  func.func @transform_9(%arg0: i32) -> (i32, i32) {
    %c0_i32 = arith.constant 0 : i32
    %c0_i32_0 = arith.constant 0 : i32
    return %arg0, %c0_i32 : i32, i32
  }
}

</mosaic_0001>

<llo_original>
// kernel: tpu_custom_call.1
$region0: #{tpu_custom_call.1}
  #allocation0 [shape = 'u32[]', space=smem, size = 0x4, offset = 0x4, fixed_abs, tag = 'smem constant byte address 0x4 - core index']
  #allocation1 [shape = 'u32[144,128]{1,0:T(1,128)}', space=vmem, size = 0x12000, scoped, tag = 'internal scratch']
  %s0 = inlined_call_operand.hbm [shape: f32[16,128], index: 0, kind: input, shape index: {}]
  %s1 = inlined_call_operand.hbm [shape: f32[8,128], index: 1, kind: input, shape index: {}]
  %s2 = inlined_call_operand.hbm [shape: f32[16,128], index: 2, kind: output, shape index: {}]
  %s3 = sld [smem:[#allocation0]]
  $region49: #{tpu_custom_call.1} parent=0
    _
  %s5 = ssub.s32 1, %s3
  %s6 = scalar_select 0, %s5, %s3
  $region1: #{tpu_custom_call.1} parent=0
    #allocation2 [shape = 'u8[8192]{0}', space=vmem, size = 0x2000, scoped, tag = 'input window, operand 0']
    #allocation3 [shape = 's32[2]{0}', space=sflag, size = 0x8, scoped, tag = 'scoped memory for tpu_custom_call.1']
    #allocation4 [shape = 's32[2]{0}', space=sflag, size = 0x8, scoped, tag = 'scoped memory for tpu_custom_call.1']
    #allocation5 [shape = 'u8[4096]{0}', space=vmem, size = 0x1000, scoped, tag = 'input window, operand 1, single buffered']
    #allocation6 [shape = 's32[1]{0}', space=sflag, size = 0x4, scoped, tag = 'scoped memory for tpu_custom_call.1']
    #allocation7 [shape = 'u8[8192]{0}', space=vmem, size = 0x2000, scoped, tag = 'output window, operand 0']
    %7 = vsyncpa [#allocation3], 0
    %s8 = scalar_lea.sflag [#allocation3], 1
    %9 = vsyncpa %s8, 0
    %10 = vsyncpa [#allocation6], 0
    %11 = vsyncpa [#allocation4], 0
    %s12 = scalar_lea.sflag [#allocation4], 1
    %13 = vsyncpa %s12, 0
    loop: start=0, step=1, limit=4
    $region2: #{tpu_custom_call.1} parent=1 // loop_pre_header
      _
    $region3: #{tpu_custom_call.1} parent=1 // loop_header
      %s15 = sphi 0, %s19
      %p16 = scmp.ge.s32.totalorder %s15, 4
      %s25 = sphi 0, %s27
      %s28 = sphi 0, %s25
      %s29 = sphi 0, %s28
      %s45 = sphi 0, %s29
      %s49 = sphi 0, %s49
      %s51 = sphi 0, %s49
      %s52 = sphi 0, %s51
      %s66 = sphi 0, %s52
      %s72 = sphi 0, %s74
      %s75 = sphi 0, %s72
      %s76 = sphi 0, %s75
      %s92 = sphi 0, %s76
    $region4: #{tpu_custom_call.1} parent=1 // loop_header_branch
      %18 = sbr.rel (%p16) target = $region8
    $region5: #{tpu_custom_call.1} parent=1 // loop_body
      %s20 = ssub.s32 %s15, 1
      %s21 = ssub.s32 %s15, 2
      %s22 = sadd.s32 %s15, 1
      %s23 = ssub.s32 %s15, %s22
      %p24 = scmp.eq.s32.totalorder %s23, 0
      %s26 = sadd.s32 %s25, 1
      %s27 = scalar_select %p24, %s25, %s26
      %p30 = pneg %p24
      %p31 = scmp.eq.s32.totalorder %s15, 1
      %p32 = por %p30, %p31
      %p33 = scmp.ne.s32.totalorder %s25, %s28
      %p34 = scmp.eq.s32.totalorder %s15, 0
      %p35 = por %p33, %p34
      %p36 = scmp.ne.s32.totalorder %s25, %s28
      %p37 = scmp.eq.s32.totalorder %s20, 1
      %p38 = por %p36, %p37
      %p39 = scmp.ne.s32.totalorder %s28, %s29
      %p40 = scmp.eq.s32.totalorder %s20, 0
      %p41 = por %p39, %p40
      %p42 = scmp.ne.s32.totalorder %s28, %s29
      %p43 = scmp.eq.s32.totalorder %s21, 1
      %p44 = por %p42, %p43
      %p46 = scmp.ne.s32.totalorder %s29, %s45
      %p47 = scmp.eq.s32.totalorder %s21, 0
      %p48 = por %p46, %p47
      %s50 = sadd.s32 %s49, 1
      %p53 = scmp.eq.s32.totalorder %s15, 1
      %p54 = scmp.ne.s32.totalorder %s49, %s51
      %p55 = scmp.eq.s32.totalorder %s15, 0
      %p56 = por %p54, %p55
      %p57 = scmp.ne.s32.totalorder %s49, %s51
      %p58 = scmp.eq.s32.totalorder %s20, 1
      %p59 = por %p57, %p58
      %p60 = scmp.ne.s32.totalorder %s51, %s52
      %p61 = scmp.eq.s32.totalorder %s20, 0
      %p62 = por %p60, %p61
      %p63 = scmp.ne.s32.totalorder %s51, %s52
      %p64 = scmp.eq.s32.totalorder %s21, 1
      %p65 = por %p63, %p64
      %p67 = scmp.ne.s32.totalorder %s52, %s66
      %p68 = scmp.eq.s32.totalorder %s21, 0
      %p69 = por %p67, %p68
      %s70 = ssub.s32 %s15, %s22
      %p71 = scmp.eq.s32.totalorder %s70, 0
      %s73 = sadd.s32 %s72, 1
      %s74 = scalar_select %p71, %s72, %s73
      %p77 = pneg %p71
      %p78 = scmp.eq.s32.totalorder %s15, 1
      %p79 = por %p77, %p78
      %p80 = scmp.ne.s32.totalorder %s72, %s75
      %p81 = scmp.eq.s32.totalorder %s15, 0
      %p82 = por %p80, %p81
      %p83 = scmp.ne.s32.totalorder %s72, %s75
      %p84 = scmp.eq.s32.totalorder %s20, 1
      %p85 = por %p83, %p84
      %p86 = scmp.ne.s32.totalorder %s75, %s76
      %p87 = scmp.eq.s32.totalorder %s20, 0
      %p88 = por %p86, %p87
      %p89 = scmp.ne.s32.totalorder %s75, %s76
      %p90 = scmp.eq.s32.totalorder %s21, 1
      %p91 = por %p89, %p90
      %p93 = scmp.ne.s32.totalorder %s76, %s92
      %p94 = scmp.eq.s32.totalorder %s21, 0
      %p95 = por %p93, %p94
      %p96 = scmp.le.s32.totalorder 1, %s15
      %p97 = scmp.lt.s32.totalorder %s15, 3
      %p98 = pnand %p96, %p97
      %p99 = pneg %p98
      // Predicated region
      $region9: #{tpu_custom_call.1} parent=5 // pred_check
        _
      $region10: #{tpu_custom_call.1} parent=5 // pred_check_branch
        %101 = sbr.rel (%p98) target = $region12
      $region11: #{tpu_custom_call.1} parent=5 // pred_region
        %s102 = ssub.s32 %s15, 1
        // Predicated region
        $region13: #{tpu_custom_call.1} parent=11 // pred_check
          %p103 = pneg %p62
        $region14: #{tpu_custom_call.1} parent=11 // pred_check_branch
          %105 = sbr.rel (%p103) target = $region16
        $region15: #{tpu_custom_call.1} parent=11 // pred_region
          %s107 = ssub.s32 128, 128
          %108 = vsyncadd [#allocation6], %s107
          %s110 = sshll.u32 [#allocation5], 4
          %s111 = int_to_ptr.vmem [resolvable:$true] %s110
          %113 = dma.hbm_to_vmem [thread:$0]  %s1, 128, %s111, [#allocation6]
        $region16: #{tpu_custom_call.1} parent=11 // pred_fallthru
          _
      $region12: #{tpu_custom_call.1} parent=5 // pred_fallthru
        _
      %p114 = scmp.lt.s32.totalorder %s15, 2
      // Predicated region
      $region17: #{tpu_custom_call.1} parent=5 // pred_check
        %p115 = pneg %p114
      $region18: #{tpu_custom_call.1} parent=5 // pred_check_branch
        %117 = sbr.rel (%p115) target = $region20
      $region19: #{tpu_custom_call.1} parent=5 // pred_region
        // Predicated region
        $region21: #{tpu_custom_call.1} parent=19 // pred_check
          %p118 = pneg %p35
        $region22: #{tpu_custom_call.1} parent=19 // pred_check_branch
          %120 = sbr.rel (%p118) target = $region24
        $region23: #{tpu_custom_call.1} parent=19 // pred_region
          %s121 = sand.u32 %s25, 1
          %s122 = scalar_lea.sflag [#allocation3], %s121
          %s123 = sand.u32 %s25, 1
          %s124 = smul.addr %s123, 8
          %s125 = scalar_lea.vmem [#allocation2], %s124
          %s127 = ssub.s32 128, 128
          %128 = vsyncadd %s122, %s127
          %s129 = smul.addr %s15, 128
          %s130 = scalar_lea.hbm %s0, %s129
          %s132 = sshll.u32 %s125, 4
          %s133 = int_to_ptr.vmem [resolvable:$true] %s132
          %135 = dma.hbm_to_vmem [thread:$0]  %s130, 128, %s133, %s122
        $region24: #{tpu_custom_call.1} parent=19 // pred_fallthru
          _
      $region20: #{tpu_custom_call.1} parent=5 // pred_fallthru
        _
      %p136 = scmp.le.s32.totalorder 1, %s15
      %p137 = scmp.lt.s32.totalorder %s15, 3
      %p138 = pnand %p136, %p137
      %p139 = pneg %p138
      // Predicated region
      $region25: #{tpu_custom_call.1} parent=5 // pred_check
        _
      $region26: #{tpu_custom_call.1} parent=5 // pred_check_branch
        %141 = sbr.rel (%p138) target = $region28
      $region27: #{tpu_custom_call.1} parent=5 // pred_region
        %s142 = ssub.s32 %s15, 1
        %s143 = sand.u32 %s28, 1
        %s144 = scalar_lea.sflag [#allocation3], %s143
        %s145 = sand.u32 %s28, 1
        %s146 = smul.addr %s145, 8
        %s147 = scalar_lea.vmem [#allocation2], %s146
        // Predicated region
        $region29: #{tpu_custom_call.1} parent=27 // pred_check
          %p148 = pneg %p41
        $region30: #{tpu_custom_call.1} parent=27 // pred_check_branch
          %150 = sbr.rel (%p148) target = $region32
        $region31: #{tpu_custom_call.1} parent=27 // pred_region
          %151 = dma.done %s144, 128
        $region32: #{tpu_custom_call.1} parent=27 // pred_fallthru
          _
        // Predicated region
        $region33: #{tpu_custom_call.1} parent=27 // pred_check
          %p152 = pneg %p62
        $region34: #{tpu_custom_call.1} parent=27 // pred_check_branch
          %154 = sbr.rel (%p152) target = $region36
        $region35: #{tpu_custom_call.1} parent=27 // pred_region
          %155 = dma.done [#allocation6], 128
        $region36: #{tpu_custom_call.1} parent=27 // pred_fallthru
          _
        %s156 = sand.u32 %s28, 1
        %s157 = scalar_lea.sflag [#allocation3], %s156
        %s158 = sand.u32 %s28, 1
        %s159 = smul.addr %s158, 8
        %s160 = scalar_lea.vmem [#allocation2], %s159
        %p161 = pneg %p41
        %p162 = pneg %p38
        %p163 = pneg %p62
        %p164 = pneg %p59
        %p165 = pneg %p88
        %p166 = pneg %p85
        %s167 = sand.u32 %s75, 1
        %s168 = scalar_lea.sflag [#allocation4], %s167
        %s169 = sand.u32 %s75, 1
        %s170 = smul.addr %s169, 8
        %s171 = scalar_lea.vmem [#allocation7], %s170
        %v172 = vld [vmem:[%s147] sm:$0xff]
        %v173 = vld [vmem:[#allocation5] sm:$0xff]
        %v174 = vadd.f32 %v172, %v173
        %175 = vst [vmem:[%s171] sm:$0xff] %v174
        %s176 = sand.u32 %s75, 1
        %s177 = scalar_lea.sflag [#allocation4], %s176
        %s178 = sand.u32 %s75, 1
        %s179 = smul.addr %s178, 8
        %s180 = scalar_lea.vmem [#allocation7], %s179
        // Predicated region
        $region37: #{tpu_custom_call.1} parent=27 // pred_check
          %p181 = pneg %p85
        $region38: #{tpu_custom_call.1} parent=27 // pred_check_branch
          %183 = sbr.rel (%p181) target = $region40
        $region39: #{tpu_custom_call.1} parent=27 // pred_region
          %s185 = ssub.s32 128, 128
          %186 = vsyncadd %s177, %s185
          %s187 = smul.addr %s20, 128
          %s188 = scalar_lea.hbm %s2, %s187
          %s190 = sshll.u32 %s180, 4
          %s191 = int_to_ptr.vmem [resolvable:$true] %s190
          %193 = dma.vmem_to_hbm [thread:$0]  %s191, 128, %s188, %s177
        $region40: #{tpu_custom_call.1} parent=27 // pred_fallthru
          _
      $region28: #{tpu_custom_call.1} parent=5 // pred_fallthru
        _
      %p194 = scmp.le.s32.totalorder 2, %s15
      // Predicated region
      $region41: #{tpu_custom_call.1} parent=5 // pred_check
        %p195 = pneg %p194
      $region42: #{tpu_custom_call.1} parent=5 // pred_check_branch
        %197 = sbr.rel (%p195) target = $region44
      $region43: #{tpu_custom_call.1} parent=5 // pred_region
        %s198 = ssub.s32 %s15, 2
        // Predicated region
        $region45: #{tpu_custom_call.1} parent=43 // pred_check
          %p199 = pneg %p91
        $region46: #{tpu_custom_call.1} parent=43 // pred_check_branch
          %201 = sbr.rel (%p199) target = $region48
        $region47: #{tpu_custom_call.1} parent=43 // pred_region
          %s202 = sand.u32 %s76, 1
          %s203 = scalar_lea.sflag [#allocation4], %s202
          %s204 = sand.u32 %s76, 1
          %s205 = smul.addr %s204, 8
          %s206 = scalar_lea.vmem [#allocation7], %s205
          %207 = dma.done %s203, 128
        $region48: #{tpu_custom_call.1} parent=43 // pred_fallthru
          _
      $region44: #{tpu_custom_call.1} parent=5 // pred_fallthru
        _
    $region6: #{tpu_custom_call.1} parent=1 // loop_footer
      %s19 = sadd.s32 1, %s15
    $region7: #{tpu_custom_call.1} parent=1 // loop_footer_branch
      %14 = sbr.rel target = $region3
    $region8: #{tpu_custom_call.1} parent=1 // loop_exit
      _
    %208 = vsyncpa [#allocation3], 1
    %s209 = scalar_lea.sflag [#allocation3], 1
    %210 = vsyncpa %s209, 1
    %211 = vsyncpa [#allocation6], 1
    %212 = vsyncpa [#allocation4], 1
    %s213 = scalar_lea.sflag [#allocation4], 1
    %214 = vsyncpa %s213, 1

// kernel: _lambda_.1
$region0: #{_lambda_.1}
  #allocation0 [shape = 'u32[]', space=smem, size = 0x4, offset = 0x4, fixed_abs, tag = 'smem constant byte address 0x4 - core index']
  #allocation1 [shape = 'u32[144,128]{1,0:T(1,128)}', space=vmem, size = 0x12000, scoped, tag = 'internal scratch']
  %s0 = inlined_call_operand.vmem [shape: f32[2,1024], index: 0, kind: input, shape index: {}]
  %s1 = inlined_call_operand.vmem [shape: f32[2,1024], index: 1, kind: input, shape index: {}]
  %s2 = inlined_call_operand.vmem [shape: f32[2,1024], index: 2, kind: input, shape index: {}]
  %s3 = inlined_call_operand.hbm [shape: bf16[1024,128], index: 3, kind: input, shape index: {}]
  %s4 = inlined_call_operand.vmem [shape: f32[1,128], index: 4, kind: input, shape index: {}]
  %s5 = inlined_call_operand.vmem [shape: bf16[128,128], index: 5, kind: input, shape index: {}]
  %s6 = inlined_call_operand.vmem [shape: f32[1,128], index: 6, kind: input, shape index: {}]
  %s7 = inlined_call_operand.vmem [shape: bf16[2,128], index: 7, kind: output, shape index: {0}]
  %s8 = inlined_call_operand.vmem [shape: bf16[2,128], index: 8, kind: output, shape index: {1}]
  %s9 = inlined_call_operand.vmem [shape: bf16[2,128], index: 9, kind: output, shape index: {2}]
  %10 = xla_tuple %s7, %s8, %s9
  %s11 = sld [smem:[#allocation0]]
  $region58: #{_lambda_.1} parent=0
    _
  %s13 = ssub.s32 1, %s11
  %s14 = scalar_select 0, %s13, %s11
  $region1: #{_lambda_.1} parent=0
    #allocation2 [shape = 'u8[262144]{0}', space=vmem, size = 0x40000, scoped, tag = 'input window, operand 3, single buffered']
    #allocation3 [shape = 's32[1]{0}', space=sflag, size = 0x4, scoped, tag = 'scoped memory for _lambda_.1']
    %15 = vsyncpa [#allocation3], 0
    // Predicated region
    $region2: #{_lambda_.1} parent=1 // pred_check
      _
    $region3: #{_lambda_.1} parent=1 // pred_check_branch
      %17 = sbr.rel (0) target = $region5
    $region4: #{_lambda_.1} parent=1 // pred_region
      _
    $region5: #{_lambda_.1} parent=1 // pred_fallthru
      _
    // Predicated region
    $region6: #{_lambda_.1} parent=1 // pred_check
      _
    $region7: #{_lambda_.1} parent=1 // pred_check_branch
      %19 = sbr.rel (0) target = $region9
    $region8: #{_lambda_.1} parent=1 // pred_region
      _
    $region9: #{_lambda_.1} parent=1 // pred_fallthru
      _
    // Predicated region
    $region10: #{_lambda_.1} parent=1 // pred_check
      _
    $region11: #{_lambda_.1} parent=1 // pred_check_branch
      %21 = sbr.rel (0) target = $region13
    $region12: #{_lambda_.1} parent=1 // pred_region
      _
    $region13: #{_lambda_.1} parent=1 // pred_fallthru
      _
    // Predicated region
    $region14: #{_lambda_.1} parent=1 // pred_check
      _
    $region15: #{_lambda_.1} parent=1 // pred_check_branch
      %23 = sbr.rel (0) target = $region17
    $region16: #{_lambda_.1} parent=1 // pred_region
      %s25 = ssub.s32 8192, 8192
      %26 = vsyncadd [#allocation3], %s25
      %s27 = sshll.u32 [#allocation2], 4
      %s28 = int_to_ptr.vmem [resolvable:$true] %s27
      %33 = dma.hbm_to_vmem [thread:$0]  %s3, 8192, %s28, [#allocation3], 64, 64, 4
    $region17: #{_lambda_.1} parent=1 // pred_fallthru
      _
    // Predicated region
    $region18: #{_lambda_.1} parent=1 // pred_check
      _
    $region19: #{_lambda_.1} parent=1 // pred_check_branch
      %35 = sbr.rel (0) target = $region21
    $region20: #{_lambda_.1} parent=1 // pred_region
      _
    $region21: #{_lambda_.1} parent=1 // pred_fallthru
      _
    // Predicated region
    $region22: #{_lambda_.1} parent=1 // pred_check
      _
    $region23: #{_lambda_.1} parent=1 // pred_check_branch
      %37 = sbr.rel (0) target = $region25
    $region24: #{_lambda_.1} parent=1 // pred_region
      _
    $region25: #{_lambda_.1} parent=1 // pred_fallthru
      _
    // Predicated region
    $region26: #{_lambda_.1} parent=1 // pred_check
      _
    $region27: #{_lambda_.1} parent=1 // pred_check_branch
      %39 = sbr.rel (0) target = $region29
    $region28: #{_lambda_.1} parent=1 // pred_region
      _
    $region29: #{_lambda_.1} parent=1 // pred_fallthru
      _
    // Predicated region
    $region30: #{_lambda_.1} parent=1 // pred_check
      _
    $region31: #{_lambda_.1} parent=1 // pred_check_branch
      %41 = sbr.rel (0) target = $region33
    $region32: #{_lambda_.1} parent=1 // pred_region
      %42 = dma.done [#allocation3], 8192
    $region33: #{_lambda_.1} parent=1 // pred_fallthru
      _
    %v44 = vld [vmem:[#allocation2] sm:$0xf]
    %v45 = vld [vmem:[#allocation2 + $0x4] sm:$0xf]
    %v46 = vld [vmem:[#allocation2 + $0x8] sm:$0xf]
    %v47 = vld [vmem:[#allocation2 + $0xc] sm:$0xf]
    %v48 = vld [vmem:[#allocation2 + $0x10] sm:$0xf]
    %v49 = vld [vmem:[#allocation2 + $0x14] sm:$0xf]
    %v50 = vld [vmem:[#allocation2 + $0x18] sm:$0xf]
    %v51 = vld [vmem:[#allocation2 + $0x1c] sm:$0xf]
    %v52 = vld [vmem:[#allocation2 + $0x20] sm:$0xf]
    %v53 = vld [vmem:[#allocation2 + $0x24] sm:$0xf]
    %v54 = vld [vmem:[#allocation2 + $0x28] sm:$0xf]
    %v55 = vld [vmem:[#allocation2 + $0x2c] sm:$0xf]
    %v56 = vld [vmem:[#allocation2 + $0x30] sm:$0xf]
    %v57 = vld [vmem:[#allocation2 + $0x34] sm:$0xf]
    %v58 = vld [vmem:[#allocation2 + $0x38] sm:$0xf]
    %v59 = vld [vmem:[#allocation2 + $0x3c] sm:$0xf]
    %v60 = vld [vmem:[#allocation2 + $0x40] sm:$0xf]
    %v61 = vld [vmem:[#allocation2 + $0x44] sm:$0xf]
    %v62 = vld [vmem:[#allocation2 + $0x48] sm:$0xf]
    %v63 = vld [vmem:[#allocation2 + $0x4c] sm:$0xf]
    %v64 = vld [vmem:[#allocation2 + $0x50] sm:$0xf]
    %v65 = vld [vmem:[#allocation2 + $0x54] sm:$0xf]
    %v66 = vld [vmem:[#allocation2 + $0x58] sm:$0xf]
    %v67 = vld [vmem:[#allocation2 + $0x5c] sm:$0xf]
    %v68 = vld [vmem:[#allocation2 + $0x60] sm:$0xf]
    %v69 = vld [vmem:[#allocation2 + $0x64] sm:$0xf]
    %v70 = vld [vmem:[#allocation2 + $0x68] sm:$0xf]
    %v71 = vld [vmem:[#allocation2 + $0x6c] sm:$0xf]
    %v72 = vld [vmem:[#allocation2 + $0x70] sm:$0xf]
    %v73 = vld [vmem:[#allocation2 + $0x74] sm:$0xf]
    %v74 = vld [vmem:[#allocation2 + $0x78] sm:$0xf]
    %v75 = vld [vmem:[#allocation2 + $0x7c] sm:$0xf]
    %v76 = vld [vmem:[#allocation2 + $0x80] sm:$0xf]
    %v77 = vld [vmem:[#allocation2 + $0x84] sm:$0xf]
    %v78 = vld [vmem:[#allocation2 + $0x88] sm:$0xf]
    %v79 = vld [vmem:[#allocation2 + $0x8c] sm:$0xf]
    %v80 = vld [vmem:[#allocation2 + $0x90] sm:$0xf]
    %v81 = vld [vmem:[#allocation2 + $0x94] sm:$0xf]
    %v82 = vld [vmem:[#allocation2 + $0x98] sm:$0xf]
    %v83 = vld [vmem:[#allocation2 + $0x9c] sm:$0xf]
    %v84 = vld [vmem:[#allocation2 + $0xa0] sm:$0xf]
    %v85 = vld [vmem:[#allocation2 + $0xa4] sm:$0xf]
    %v86 = vld [vmem:[#allocation2 + $0xa8] sm:$0xf]
    %v87 = vld [vmem:[#allocation2 + $0xac] sm:$0xf]
    %v88 = vld [vmem:[#allocation2 + $0xb0] sm:$0xf]
    %v89 = vld [vmem:[#allocation2 + $0xb4] sm:$0xf]
    %v90 = vld [vmem:[#allocation2 + $0xb8] sm:$0xf]
    %v91 = vld [vmem:[#allocation2 + $0xbc] sm:$0xf]
    %v92 = vld [vmem:[#allocation2 + $0xc0] sm:$0xf]
    %v93 = vld [vmem:[#allocation2 + $0xc4] sm:$0xf]
    %v94 = vld [vmem:[#allocation2 + $0xc8] sm:$0xf]
    %v95 = vld [vmem:[#allocation2 + $0xcc] sm:$0xf]
    %v96 = vld [vmem:[#allocation2 + $0xd0] sm:$0xf]
    %v97 = vld [vmem:[#allocation2 + $0xd4] sm:$0xf]
    %v98 = vld [vmem:[#allocation2 + $0xd8] sm:$0xf]
    %v99 = vld [vmem:[#allocation2 + $0xdc] sm:$0xf]
    %v100 = vld [vmem:[#allocation2 + $0xe0] sm:$0xf]
    %v101 = vld [vmem:[#allocation2 + $0xe4] sm:$0xf]
    %v102 = vld [vmem:[#allocation2 + $0xe8] sm:$0xf]
    %v103 = vld [vmem:[#allocation2 + $0xec] sm:$0xf]
    %v104 = vld [vmem:[#allocation2 + $0xf0] sm:$0xf]
    %v105 = vld [vmem:[#allocation2 + $0xf4] sm:$0xf]
    %v106 = vld [vmem:[#allocation2 + $0xf8] sm:$0xf]
    %v107 = vld [vmem:[#allocation2 + $0xfc] sm:$0xf]
    %v108 = vld [vmem:[#allocation2 + $0x100] sm:$0xf]
    %v109 = vld [vmem:[#allocation2 + $0x104] sm:$0xf]
    %v110 = vld [vmem:[#allocation2 + $0x108] sm:$0xf]
    %v111 = vld [vmem:[#allocation2 + $0x10c] sm:$0xf]
    %v112 = vld [vmem:[#allocation2 + $0x110] sm:$0xf]
    %v113 = vld [vmem:[#allocation2 + $0x114] sm:$0xf]
    %v114 = vld [vmem:[#allocation2 + $0x118] sm:$0xf]
    %v115 = vld [vmem:[#allocation2 + $0x11c] sm:$0xf]
    %v116 = vld [vmem:[#allocation2 + $0x120] sm:$0xf]
    %v117 = vld [vmem:[#allocation2 + $0x124] sm:$0xf]
    %v118 = vld [vmem:[#allocation2 + $0x128] sm:$0xf]
    %v119 = vld [vmem:[#allocation2 + $0x12c] sm:$0xf]
    %v120 = vld [vmem:[#allocation2 + $0x130] sm:$0xf]
    %v121 = vld [vmem:[#allocation2 + $0x134] sm:$0xf]
    %v122 = vld [vmem:[#allocation2 + $0x138] sm:$0xf]
    %v123 = vld [vmem:[#allocation2 + $0x13c] sm:$0xf]
    %v124 = vld [vmem:[#allocation2 + $0x140] sm:$0xf]
    %v125 = vld [vmem:[#allocation2 + $0x144] sm:$0xf]
    %v126 = vld [vmem:[#allocation2 + $0x148] sm:$0xf]
    %v127 = vld [vmem:[#allocation2 + $0x14c] sm:$0xf]
    %v128 = vld [vmem:[#allocation2 + $0x150] sm:$0xf]
    %v129 = vld [vmem:[#allocation2 + $0x154] sm:$0xf]
    %v130 = vld [vmem:[#allocation2 + $0x158] sm:$0xf]
    %v131 = vld [vmem:[#allocation2 + $0x15c] sm:$0xf]
    %v132 = vld [vmem:[#allocation2 + $0x160] sm:$0xf]
    %v133 = vld [vmem:[#allocation2 + $0x164] sm:$0xf]
    %v134 = vld [vmem:[#allocation2 + $0x168] sm:$0xf]
    %v135 = vld [vmem:[#allocation2 + $0x16c] sm:$0xf]
    %v136 = vld [vmem:[#allocation2 + $0x170] sm:$0xf]
    %v137 = vld [vmem:[#allocation2 + $0x174] sm:$0xf]
    %v138 = vld [vmem:[#allocation2 + $0x178] sm:$0xf]
    %v139 = vld [vmem:[#allocation2 + $0x17c] sm:$0xf]
    %v140 = vld [vmem:[#allocation2 + $0x180] sm:$0xf]
    %v141 = vld [vmem:[#allocation2 + $0x184] sm:$0xf]
    %v142 = vld [vmem:[#allocation2 + $0x188] sm:$0xf]
    %v143 = vld [vmem:[#allocation2 + $0x18c] sm:$0xf]
    %v144 = vld [vmem:[#allocation2 + $0x190] sm:$0xf]
    %v145 = vld [vmem:[#allocation2 + $0x194] sm:$0xf]
    %v146 = vld [vmem:[#allocation2 + $0x198] sm:$0xf]
    %v147 = vld [vmem:[#allocation2 + $0x19c] sm:$0xf]
    %v148 = vld [vmem:[#allocation2 + $0x1a0] sm:$0xf]
    %v149 = vld [vmem:[#allocation2 + $0x1a4] sm:$0xf]
    %v150 = vld [vmem:[#allocation2 + $0x1a8] sm:$0xf]
    %v151 = vld [vmem:[#allocation2 + $0x1ac] sm:$0xf]
    %v152 = vld [vmem:[#allocation2 + $0x1b0] sm:$0xf]
    %v153 = vld [vmem:[#allocation2 + $0x1b4] sm:$0xf]
    %v154 = vld [vmem:[#allocation2 + $0x1b8] sm:$0xf]
    %v155 = vld [vmem:[#allocation2 + $0x1bc] sm:$0xf]
    %v156 = vld [vmem:[#allocation2 + $0x1c0] sm:$0xf]
    %v157 = vld [vmem:[#allocation2 + $0x1c4] sm:$0xf]
    %v158 = vld [vmem:[#allocation2 + $0x1c8] sm:$0xf]
    %v159 = vld [vmem:[#allocation2 + $0x1cc] sm:$0xf]
    %v160 = vld [vmem:[#allocation2 + $0x1d0] sm:$0xf]
    %v161 = vld [vmem:[#allocation2 + $0x1d4] sm:$0xf]
    %v162 = vld [vmem:[#allocation2 + $0x1d8] sm:$0xf]
    %v163 = vld [vmem:[#allocation2 + $0x1dc] sm:$0xf]
    %v164 = vld [vmem:[#allocation2 + $0x1e0] sm:$0xf]
    %v165 = vld [vmem:[#allocation2 + $0x1e4] sm:$0xf]
    %v166 = vld [vmem:[#allocation2 + $0x1e8] sm:$0xf]
    %v167 = vld [vmem:[#allocation2 + $0x1ec] sm:$0xf]
    %v168 = vld [vmem:[#allocation2 + $0x1f0] sm:$0xf]
    %v169 = vld [vmem:[#allocation2 + $0x1f4] sm:$0xf]
    %v170 = vld [vmem:[#allocation2 + $0x1f8] sm:$0xf]
    %v171 = vld [vmem:[#allocation2 + $0x1fc] sm:$0xf]
    %v172 = vld [vmem:[%s4] sm:$0x1]
    %v173 = vld [vmem:[%s5] sm:$0xf]
    %v174 = vld [vmem:[%s5 + $0x4] sm:$0xf]
    %v175 = vld [vmem:[%s5 + $0x8] sm:$0xf]
    %v176 = vld [vmem:[%s5 + $0xc] sm:$0xf]
    %v177 = vld [vmem:[%s5 + $0x10] sm:$0xf]
    %v178 = vld [vmem:[%s5 + $0x14] sm:$0xf]
    %v179 = vld [vmem:[%s5 + $0x18] sm:$0xf]
    %v180 = vld [vmem:[%s5 + $0x1c] sm:$0xf]
    %v181 = vld [vmem:[%s5 + $0x20] sm:$0xf]
    %v182 = vld [vmem:[%s5 + $0x24] sm:$0xf]
    %v183 = vld [vmem:[%s5 + $0x28] sm:$0xf]
    %v184 = vld [vmem:[%s5 + $0x2c] sm:$0xf]
    %v185 = vld [vmem:[%s5 + $0x30] sm:$0xf]
    %v186 = vld [vmem:[%s5 + $0x34] sm:$0xf]
    %v187 = vld [vmem:[%s5 + $0x38] sm:$0xf]
    %v188 = vld [vmem:[%s5 + $0x3c] sm:$0xf]
    %v189 = vld [vmem:[%s6] sm:$0x1]
    %v190 = vld [vmem:[%s0] sm:$0xff]
    %v191 = vld [vmem:[%s0 + $0x8] sm:$0xff]
    %v194 = vcombine.high %v190, %v190
    %v196 = vunpack.c.l.s4 1983009808
    %v197 = vunpack.c.0.s8 %v196
    %v198 = vlaneseq
    %v199 = vshrl.u32 %v198, 7
    %v200 = vsub.s32 %v197, %v199
    %v201 = vrot.slane %v190, %v200
    %v203 = vunpack.c.l.s4 1983009808
    %v204 = vunpack.c.0.s8 %v203
    %v205 = vlaneseq
    %v206 = vshrl.u32 %v205, 7
    %v207 = vsub.s32 %v204, %v206
    %v208 = vrot.slane %v194, %v207
    %v209 = vcombine.high %v201, %v201
    %v210 = vcombine.high %v208, %v208
    %v211 = vcombine.high %v191, %v191
    %v213 = vunpack.c.l.s4 1983009808
    %v214 = vunpack.c.0.s8 %v213
    %v215 = vlaneseq
    %v216 = vshrl.u32 %v215, 7
    %v217 = vsub.s32 %v214, %v216
    %v218 = vrot.slane %v191, %v217
    %v220 = vunpack.c.l.s4 1983009808
    %v221 = vunpack.c.0.s8 %v220
    %v222 = vlaneseq
    %v223 = vshrl.u32 %v222, 7
    %v224 = vsub.s32 %v221, %v223
    %v225 = vrot.slane %v211, %v224
    %v226 = vcombine.high %v218, %v218
    %v227 = vcombine.high %v225, %v225
    %v236 = vpack.c.bf16 %v201, %v201
    %v237 = vpack.c.bf16 %v209, %v209
    %v238 = vpack.c.bf16 %v208, %v208
    %v239 = vpack.c.bf16 %v210, %v210
    %v240 = vpack.c.bf16 %v218, %v218
    %v241 = vpack.c.bf16 %v226, %v226
    %v242 = vpack.c.bf16 %v225, %v225
    %v243 = vpack.c.bf16 %v227, %v227
    %v245 = vlaneseq
    %v246 = vshrl.u32 %v245, 7
    %v247 = vsub.s32 0, %v246
    %v248 = vrot.slane %v172, %v247
    %v378 = vunpack.c.l.b16 %v44
    %v379 = vunpack.c.l.b16 %v45
    %v380 = vunpack.c.l.b16 %v46
    %v381 = vunpack.c.l.b16 %v47
    %v382 = vunpack.c.l.b16 %v48
    %v383 = vunpack.c.l.b16 %v49
    %v384 = vunpack.c.l.b16 %v50
    %v385 = vunpack.c.l.b16 %v51
    %v386 = vunpack.c.l.b16 %v52
    %v387 = vunpack.c.l.b16 %v53
    %v388 = vunpack.c.l.b16 %v54
    %v389 = vunpack.c.l.b16 %v55
    %v390 = vunpack.c.l.b16 %v56
    %v391 = vunpack.c.l.b16 %v57
    %v392 = vunpack.c.l.b16 %v58
    %v393 = vunpack.c.l.b16 %v59
    %v394 = vunpack.c.l.b16 %v60
    %v395 = vunpack.c.l.b16 %v61
    %v396 = vunpack.c.l.b16 %v62
    %v397 = vunpack.c.l.b16 %v63
    %v398 = vunpack.c.l.b16 %v64
    %v399 = vunpack.c.l.b16 %v65
    %v400 = vunpack.c.l.b16 %v66
    %v401 = vunpack.c.l.b16 %v67
    %v402 = vunpack.c.l.b16 %v68
    %v403 = vunpack.c.l.b16 %v69
    %v404 = vunpack.c.l.b16 %v70
    %v405 = vunpack.c.l.b16 %v71
    %v406 = vunpack.c.l.b16 %v72
    %v407 = vunpack.c.l.b16 %v73
    %v408 = vunpack.c.l.b16 %v74
    %v409 = vunpack.c.l.b16 %v75
    %v410 = vunpack.c.l.b16 %v76
    %v411 = vunpack.c.l.b16 %v77
    %v412 = vunpack.c.l.b16 %v78
    %v413 = vunpack.c.l.b16 %v79
    %v414 = vunpack.c.l.b16 %v80
    %v415 = vunpack.c.l.b16 %v81
    %v416 = vunpack.c.l.b16 %v82
    %v417 = vunpack.c.l.b16 %v83
    %v418 = vunpack.c.l.b16 %v84
    %v419 = vunpack.c.l.b16 %v85
    %v420 = vunpack.c.l.b16 %v86
    %v421 = vunpack.c.l.b16 %v87
    %v422 = vunpack.c.l.b16 %v88
    %v423 = vunpack.c.l.b16 %v89
    %v424 = vunpack.c.l.b16 %v90
    %v425 = vunpack.c.l.b16 %v91
    %v426 = vunpack.c.l.b16 %v92
    %v427 = vunpack.c.l.b16 %v93
    %v428 = vunpack.c.l.b16 %v94
    %v429 = vunpack.c.l.b16 %v95
    %v430 = vunpack.c.l.b16 %v96
    %v431 = vunpack.c.l.b16 %v97
    %v432 = vunpack.c.l.b16 %v98
    %v433 = vunpack.c.l.b16 %v99
    %v434 = vunpack.c.l.b16 %v100
    %v435 = vunpack.c.l.b16 %v101
    %v436 = vunpack.c.l.b16 %v102
    %v437 = vunpack.c.l.b16 %v103
    %v438 = vunpack.c.l.b16 %v104
    %v439 = vunpack.c.l.b16 %v105
    %v440 = vunpack.c.l.b16 %v106
    %v441 = vunpack.c.l.b16 %v107
    %v442 = vunpack.c.l.b16 %v108
    %v443 = vunpack.c.l.b16 %v109
    %v444 = vunpack.c.l.b16 %v110
    %v445 = vunpack.c.l.b16 %v111
    %v446 = vunpack.c.l.b16 %v112
    %v447 = vunpack.c.l.b16 %v113
    %v448 = vunpack.c.l.b16 %v114
    %v449 = vunpack.c.l.b16 %v115
    %v450 = vunpack.c.l.b16 %v116
    %v451 = vunpack.c.l.b16 %v117
    %v452 = vunpack.c.l.b16 %v118
    %v453 = vunpack.c.l.b16 %v119
    %v454 = vunpack.c.l.b16 %v120
    %v455 = vunpack.c.l.b16 %v121
    %v456 = vunpack.c.l.b16 %v122
    %v457 = vunpack.c.l.b16 %v123
    %v458 = vunpack.c.l.b16 %v124
    %v459 = vunpack.c.l.b16 %v125
    %v460 = vunpack.c.l.b16 %v126
    %v461 = vunpack.c.l.b16 %v127
    %v462 = vunpack.c.l.b16 %v128
    %v463 = vunpack.c.l.b16 %v129
    %v464 = vunpack.c.l.b16 %v130
    %v465 = vunpack.c.l.b16 %v131
    %v466 = vunpack.c.l.b16 %v132
    %v467 = vunpack.c.l.b16 %v133
    %v468 = vunpack.c.l.b16 %v134
    %v469 = vunpack.c.l.b16 %v135
    %v470 = vunpack.c.l.b16 %v136
    %v471 = vunpack.c.l.b16 %v137
    %v472 = vunpack.c.l.b16 %v138
    %v473 = vunpack.c.l.b16 %v139
    %v474 = vunpack.c.l.b16 %v140
    %v475 = vunpack.c.l.b16 %v141
    %v476 = vunpack.c.l.b16 %v142
    %v477 = vunpack.c.l.b16 %v143
    %v478 = vunpack.c.l.b16 %v144
    %v479 = vunpack.c.l.b16 %v145
    %v480 = vunpack.c.l.b16 %v146
    %v481 = vunpack.c.l.b16 %v147
    %v482 = vunpack.c.l.b16 %v148
    %v483 = vunpack.c.l.b16 %v149
    %v484 = vunpack.c.l.b16 %v150
    %v485 = vunpack.c.l.b16 %v151
    %v486 = vunpack.c.l.b16 %v152
    %v487 = vunpack.c.l.b16 %v153
    %v488 = vunpack.c.l.b16 %v154
    %v489 = vunpack.c.l.b16 %v155
    %v490 = vunpack.c.l.b16 %v156
    %v491 = vunpack.c.l.b16 %v157
    %v492 = vunpack.c.l.b16 %v158
    %v493 = vunpack.c.l.b16 %v159
    %v494 = vunpack.c.l.b16 %v160
    %v495 = vunpack.c.l.b16 %v161
    %v496 = vunpack.c.l.b16 %v162
    %v497 = vunpack.c.l.b16 %v163
    %v498 = vunpack.c.l.b16 %v164
    %v499 = vunpack.c.l.b16 %v165
    %v500 = vunpack.c.l.b16 %v166
    %v501 = vunpack.c.l.b16 %v167
    %v502 = vunpack.c.l.b16 %v168
    %v503 = vunpack.c.l.b16 %v169
    %v504 = vunpack.c.l.b16 %v170
    %v505 = vunpack.c.l.b16 %v171
    %v506 = vpack.c.b16 %v379, %v378
    %v507 = vpack.c.b16 %v381, %v380
    %v508 = vpack.c.b16 %v383, %v382
    %v509 = vpack.c.b16 %v385, %v384
    %v510 = vpack.c.b16 %v387, %v386
    %v511 = vpack.c.b16 %v389, %v388
    %v512 = vpack.c.b16 %v391, %v390
    %v513 = vpack.c.b16 %v393, %v392
    %v514 = vpack.c.b16 %v395, %v394
    %v515 = vpack.c.b16 %v397, %v396
    %v516 = vpack.c.b16 %v399, %v398
    %v517 = vpack.c.b16 %v401, %v400
    %v518 = vpack.c.b16 %v403, %v402
    %v519 = vpack.c.b16 %v405, %v404
    %v520 = vpack.c.b16 %v407, %v406
    %v521 = vpack.c.b16 %v409, %v408
    %v522 = vpack.c.b16 %v411, %v410
    %v523 = vpack.c.b16 %v413, %v412
    %v524 = vpack.c.b16 %v415, %v414
    %v525 = vpack.c.b16 %v417, %v416
    %v526 = vpack.c.b16 %v419, %v418
    %v527 = vpack.c.b16 %v421, %v420
    %v528 = vpack.c.b16 %v423, %v422
    %v529 = vpack.c.b16 %v425, %v424
    %v530 = vpack.c.b16 %v427, %v426
    %v531 = vpack.c.b16 %v429, %v428
    %v532 = vpack.c.b16 %v431, %v430
    %v533 = vpack.c.b16 %v433, %v432
    %v534 = vpack.c.b16 %v435, %v434
    %v535 = vpack.c.b16 %v437, %v436
    %v536 = vpack.c.b16 %v439, %v438
    %v537 = vpack.c.b16 %v441, %v440
    %v538 = vpack.c.b16 %v443, %v442
    %v539 = vpack.c.b16 %v445, %v444
    %v540 = vpack.c.b16 %v447, %v446
    %v541 = vpack.c.b16 %v449, %v448
    %v542 = vpack.c.b16 %v451, %v450
    %v543 = vpack.c.b16 %v453, %v452
    %v544 = vpack.c.b16 %v455, %v454
    %v545 = vpack.c.b16 %v457, %v456
    %v546 = vpack.c.b16 %v459, %v458
    %v547 = vpack.c.b16 %v461, %v460
    %v548 = vpack.c.b16 %v463, %v462
    %v549 = vpack.c.b16 %v465, %v464
    %v550 = vpack.c.b16 %v467, %v466
    %v551 = vpack.c.b16 %v469, %v468
    %v552 = vpack.c.b16 %v471, %v470
    %v553 = vpack.c.b16 %v473, %v472
    %v554 = vpack.c.b16 %v475, %v474
    %v555 = vpack.c.b16 %v477, %v476
    %v556 = vpack.c.b16 %v479, %v478
    %v557 = vpack.c.b16 %v481, %v480
    %v558 = vpack.c.b16 %v483, %v482
    %v559 = vpack.c.b16 %v485, %v484
    %v560 = vpack.c.b16 %v487, %v486
    %v561 = vpack.c.b16 %v489, %v488
    %v562 = vpack.c.b16 %v491, %v490
    %v563 = vpack.c.b16 %v493, %v492
    %v564 = vpack.c.b16 %v495, %v494
    %v565 = vpack.c.b16 %v497, %v496
    %v566 = vpack.c.b16 %v499, %v498
    %v567 = vpack.c.b16 %v501, %v500
    %v568 = vpack.c.b16 %v503, %v502
    %v569 = vpack.c.b16 %v505, %v504
    %634 = vmatprep.subr.bf16.mxu0 0
    %635 = vmatpush1.bf16.msra.mxu0 %v513
    %636 = vmatprep.subr.bf16.mxu0 0
    %637 = vmatpush1.bf16.msra.mxu0 %v512
    %638 = vmatprep.subr.bf16.mxu0 0
    %639 = vmatpush1.bf16.msra.mxu0 %v511
    %640 = vmatprep.subr.bf16.mxu0 0
    %641 = vmatpush1.bf16.msra.mxu0 %v510
    %642 = vmatprep.subr.bf16.mxu0 0
    %643 = vmatpush1.bf16.msra.mxu0 %v509
    %644 = vmatprep.subr.bf16.mxu0 0
    %645 = vmatpush1.bf16.msra.mxu0 %v508
    %646 = vmatprep.subr.bf16.mxu0 0
    %647 = vmatpush1.bf16.msra.mxu0 %v507
    %648 = vmatprep.subr.bf16.mxu0 0
    %649 = vmatpush1.bf16.msra.mxu0 %v506
    %650 = vmatprep.subr.bf16.mxu0 0
    %651 = vmatpush2.bf16.msra.mxu0 %v521
    %652 = vmatprep.subr.bf16.mxu0 0
    %653 = vmatpush2.bf16.msra.mxu0 %v520
    %654 = vmatprep.subr.bf16.mxu0 0
    %655 = vmatpush2.bf16.msra.mxu0 %v519
    %656 = vmatprep.subr.bf16.mxu0 0
    %657 = vmatpush2.bf16.msra.mxu0 %v518
    %658 = vmatprep.subr.bf16.mxu0 0
    %659 = vmatpush2.bf16.msra.mxu0 %v517
    %660 = vmatprep.subr.bf16.mxu0 0
    %661 = vmatpush2.bf16.msra.mxu0 %v516
    %662 = vmatprep.subr.bf16.mxu0 0
    %663 = vmatpush2.bf16.msra.mxu0 %v515
    %664 = vmatprep.subr.bf16.mxu0 0
    %665 = vmatpush2.bf16.msra.mxu0 %v514
    %666 = vmatprep.mubr.bf16.mxu0 %v237
    %667 = vmatmul.mubr.bf16.gmra.mxu0 %v236
    %v668 = vpop.f32.mrf.mxu0
    %v669 = vadd.f32 %v248, %v668
    %v670 = vpop.f32.mrf.mxu0
    %v671 = vpop.f32.mrf.mxu0
    %v672 = vpop.f32.mrf.mxu0
    %673 = vdwg.mxu0
    %674 = vmatprep.subr.bf16.mxu0 0
    %675 = vmatpush1.bf16.msra.mxu0 %v529
    %676 = vmatprep.subr.bf16.mxu0 0
    %677 = vmatpush1.bf16.msra.mxu0 %v528
    %678 = vmatprep.subr.bf16.mxu0 0
    %679 = vmatpush1.bf16.msra.mxu0 %v527
    %680 = vmatprep.subr.bf16.mxu0 0
    %681 = vmatpush1.bf16.msra.mxu0 %v526
    %682 = vmatprep.subr.bf16.mxu0 0
    %683 = vmatpush1.bf16.msra.mxu0 %v525
    %684 = vmatprep.subr.bf16.mxu0 0
    %685 = vmatpush1.bf16.msra.mxu0 %v524
    %686 = vmatprep.subr.bf16.mxu0 0
    %687 = vmatpush1.bf16.msra.mxu0 %v523
    %688 = vmatprep.subr.bf16.mxu0 0
    %689 = vmatpush1.bf16.msra.mxu0 %v522
    %690 = vmatprep.subr.bf16.mxu0 0
    %691 = vmatpush2.bf16.msra.mxu0 %v537
    %692 = vmatprep.subr.bf16.mxu0 0
    %693 = vmatpush2.bf16.msra.mxu0 %v536
    %694 = vmatprep.subr.bf16.mxu0 0
    %695 = vmatpush2.bf16.msra.mxu0 %v535
    %696 = vmatprep.subr.bf16.mxu0 0
    %697 = vmatpush2.bf16.msra.mxu0 %v534
    %698 = vmatprep.subr.bf16.mxu0 0
    %699 = vmatpush2.bf16.msra.mxu0 %v533
    %700 = vmatprep.subr.bf16.mxu0 0
    %701 = vmatpush2.bf16.msra.mxu0 %v532
    %702 = vmatprep.subr.bf16.mxu0 0
    %703 = vmatpush2.bf16.msra.mxu0 %v531
    %704 = vmatprep.subr.bf16.mxu0 0
    %705 = vmatpush2.bf16.msra.mxu0 %v530
    %706 = vmatprep.mubr.bf16.mxu0 %v239
    %707 = vmatmul.mubr.bf16.gmra.mxu0 %v238
    %v708 = vpop.f32.mrf.mxu0
    %v709 = vadd.f32 %v669, %v708
    %v710 = vpop.f32.mrf.mxu0
    %v711 = vpop.f32.mrf.mxu0
    %v712 = vpop.f32.mrf.mxu0
    %713 = vdwg.mxu0
    %714 = vmatprep.subr.bf16.mxu0 0
    %715 = vmatpush1.bf16.msra.mxu0 %v545
    %716 = vmatprep.subr.bf16.mxu0 0
    %717 = vmatpush1.bf16.msra.mxu0 %v544
    %718 = vmatprep.subr.bf16.mxu0 0
    %719 = vmatpush1.bf16.msra.mxu0 %v543
    %720 = vmatprep.subr.bf16.mxu0 0
    %721 = vmatpush1.bf16.msra.mxu0 %v542
    %722 = vmatprep.subr.bf16.mxu0 0
    %723 = vmatpush1.bf16.msra.mxu0 %v541
    %724 = vmatprep.subr.bf16.mxu0 0
    %725 = vmatpush1.bf16.msra.mxu0 %v540
    %726 = vmatprep.subr.bf16.mxu0 0
    %727 = vmatpush1.bf16.msra.mxu0 %v539
    %728 = vmatprep.subr.bf16.mxu0 0
    %729 = vmatpush1.bf16.msra.mxu0 %v538
    %730 = vmatprep.subr.bf16.mxu0 0
    %731 = vmatpush2.bf16.msra.mxu0 %v553
    %732 = vmatprep.subr.bf16.mxu0 0
    %733 = vmatpush2.bf16.msra.mxu0 %v552
    %734 = vmatprep.subr.bf16.mxu0 0
    %735 = vmatpush2.bf16.msra.mxu0 %v551
    %736 = vmatprep.subr.bf16.mxu0 0
    %737 = vmatpush2.bf16.msra.mxu0 %v550
    %738 = vmatprep.subr.bf16.mxu0 0
    %739 = vmatpush2.bf16.msra.mxu0 %v549
    %740 = vmatprep.subr.bf16.mxu0 0
    %741 = vmatpush2.bf16.msra.mxu0 %v548
    %742 = vmatprep.subr.bf16.mxu0 0
    %743 = vmatpush2.bf16.msra.mxu0 %v547
    %744 = vmatprep.subr.bf16.mxu0 0
    %745 = vmatpush2.bf16.msra.mxu0 %v546
    %746 = vmatprep.mubr.bf16.mxu0 %v241
    %747 = vmatmul.mubr.bf16.gmra.mxu0 %v240
    %v748 = vpop.f32.mrf.mxu0
    %v749 = vadd.f32 %v709, %v748
    %v750 = vpop.f32.mrf.mxu0
    %v751 = vpop.f32.mrf.mxu0
    %v752 = vpop.f32.mrf.mxu0
    %753 = vdwg.mxu0
    %754 = vmatprep.subr.bf16.mxu0 0
    %755 = vmatpush1.bf16.msra.mxu0 %v561
    %756 = vmatprep.subr.bf16.mxu0 0
    %757 = vmatpush1.bf16.msra.mxu0 %v560
    %758 = vmatprep.subr.bf16.mxu0 0
    %759 = vmatpush1.bf16.msra.mxu0 %v559
    %760 = vmatprep.subr.bf16.mxu0 0
    %761 = vmatpush1.bf16.msra.mxu0 %v558
    %762 = vmatprep.subr.bf16.mxu0 0
    %763 = vmatpush1.bf16.msra.mxu0 %v557
    %764 = vmatprep.subr.bf16.mxu0 0
    %765 = vmatpush1.bf16.msra.mxu0 %v556
    %766 = vmatprep.subr.bf16.mxu0 0
    %767 = vmatpush1.bf16.msra.mxu0 %v555
    %768 = vmatprep.subr.bf16.mxu0 0
    %769 = vmatpush1.bf16.msra.mxu0 %v554
    %770 = vmatprep.subr.bf16.mxu0 0
    %771 = vmatpush2.bf16.msra.mxu0 %v569
    %772 = vmatprep.subr.bf16.mxu0 0
    %773 = vmatpush2.bf16.msra.mxu0 %v568
    %774 = vmatprep.subr.bf16.mxu0 0
    %775 = vmatpush2.bf16.msra.mxu0 %v567
    %776 = vmatprep.subr.bf16.mxu0 0
    %777 = vmatpush2.bf16.msra.mxu0 %v566
    %778 = vmatprep.subr.bf16.mxu0 0
    %779 = vmatpush2.bf16.msra.mxu0 %v565
    %780 = vmatprep.subr.bf16.mxu0 0
    %781 = vmatpush2.bf16.msra.mxu0 %v564
    %782 = vmatprep.subr.bf16.mxu0 0
    %783 = vmatpush2.bf16.msra.mxu0 %v563
    %784 = vmatprep.subr.bf16.mxu0 0
    %785 = vmatpush2.bf16.msra.mxu0 %v562
    %786 = vmatprep.mubr.bf16.mxu0 %v243
    %787 = vmatmul.mubr.bf16.gmra.mxu0 %v242
    %v788 = vpop.f32.mrf.mxu0
    %v789 = vadd.f32 %v749, %v788
    %v790 = vpop.f32.mrf.mxu0
    %v791 = vpop.f32.mrf.mxu0
    %v792 = vpop.f32.mrf.mxu0
    %793 = vdwg.mxu0
    %v794 = vmax.f32 %v789, 0.0
    %v795 = vpack.c.bf16 %v794, %v794
    %v797 = vlaneseq
    %v798 = vshrl.u32 %v797, 7
    %v799 = vsub.s32 0, %v798
    %v800 = vrot.slane %v189, %v799
    %v818 = vunpack.c.l.b16 %v173
    %v819 = vunpack.c.l.b16 %v174
    %v820 = vunpack.c.l.b16 %v175
    %v821 = vunpack.c.l.b16 %v176
    %v822 = vunpack.c.l.b16 %v177
    %v823 = vunpack.c.l.b16 %v178
    %v824 = vunpack.c.l.b16 %v179
    %v825 = vunpack.c.l.b16 %v180
    %v826 = vunpack.c.l.b16 %v181
    %v827 = vunpack.c.l.b16 %v182
    %v828 = vunpack.c.l.b16 %v183
    %v829 = vunpack.c.l.b16 %v184
    %v830 = vunpack.c.l.b16 %v185
    %v831 = vunpack.c.l.b16 %v186
    %v832 = vunpack.c.l.b16 %v187
    %v833 = vunpack.c.l.b16 %v188
    %v834 = vpack.c.b16 %v819, %v818
    %v835 = vpack.c.b16 %v821, %v820
    %v836 = vpack.c.b16 %v823, %v822
    %v837 = vpack.c.b16 %v825, %v824
    %v838 = vpack.c.b16 %v827, %v826
    %v839 = vpack.c.b16 %v829, %v828
    %v840 = vpack.c.b16 %v831, %v830
    %v841 = vpack.c.b16 %v833, %v832
    %850 = vmatprep.subr.bf16.mxu0 0
    %851 = vmatpush1.bf16.msra.mxu0 %v841
    %852 = vmatprep.subr.bf16.mxu0 0
    %853 = vmatpush1.bf16.msra.mxu0 %v840
    %854 = vmatprep.subr.bf16.mxu0 0
    %855 = vmatpush1.bf16.msra.mxu0 %v839
    %856 = vmatprep.subr.bf16.mxu0 0
    %857 = vmatpush1.bf16.msra.mxu0 %v838
    %858 = vmatprep.subr.bf16.mxu0 0
    %859 = vmatpush1.bf16.msra.mxu0 %v837
    %860 = vmatprep.subr.bf16.mxu0 0
    %861 = vmatpush1.bf16.msra.mxu0 %v836
    %862 = vmatprep.subr.bf16.mxu0 0
    %863 = vmatpush1.bf16.msra.mxu0 %v835
    %864 = vmatprep.subr.bf16.mxu0 0
    %865 = vmatpush1.bf16.msra.mxu0 %v834
    %866 = vmatprep.subr.bf16.mxu0 0
    %867 = vmatpush2.bf16.msra.mxu0 0
    %868 = vmatprep.subr.bf16.mxu0 0
    %869 = vmatpush2.bf16.msra.mxu0 0
    %870 = vmatprep.subr.bf16.mxu0 0
    %871 = vmatpush2.bf16.msra.mxu0 0
    %872 = vmatprep.subr.bf16.mxu0 0
    %873 = vmatpush2.bf16.msra.mxu0 0
    %874 = vmatprep.subr.bf16.mxu0 0
    %875 = vmatpush2.bf16.msra.mxu0 0
    %876 = vmatprep.subr.bf16.mxu0 0
    %877 = vmatpush2.bf16.msra.mxu0 0
    %878 = vmatprep.subr.bf16.mxu0 0
    %879 = vmatpush2.bf16.msra.mxu0 0
    %880 = vmatprep.subr.bf16.mxu0 0
    %881 = vmatpush2.bf16.msra.mxu0 0
    %882 = vmatprep.mubr.bf16.mxu0 0
    %883 = vmatmul.mubr.bf16.gmra.mxu0 %v795
    %v884 = vpop.f32.mrf.mxu0
    %v885 = vadd.f32 %v800, %v884
    %v886 = vpop.f32.mrf.mxu0
    %v887 = vpop.f32.mrf.mxu0
    %v888 = vpop.f32.mrf.mxu0
    %889 = vdwg.mxu0
    %v890 = vpack.c.bf16 %v885, %v885
    %891 = vst [vmem:[%s7] sm:$0x1] %v890
    %v892 = vld [vmem:[%s1] sm:$0xff]
    %v893 = vld [vmem:[%s1 + $0x8] sm:$0xff]
    %v896 = vcombine.high %v892, %v892
    %v898 = vunpack.c.l.s4 1983009808
    %v899 = vunpack.c.0.s8 %v898
    %v900 = vlaneseq
    %v901 = vshrl.u32 %v900, 7
    %v902 = vsub.s32 %v899, %v901
    %v903 = vrot.slane %v892, %v902
    %v905 = vunpack.c.l.s4 1983009808
    %v906 = vunpack.c.0.s8 %v905
    %v907 = vlaneseq
    %v908 = vshrl.u32 %v907, 7
    %v909 = vsub.s32 %v906, %v908
    %v910 = vrot.slane %v896, %v909
    %v911 = vcombine.high %v903, %v903
    %v912 = vcombine.high %v910, %v910
    %v913 = vcombine.high %v893, %v893
    %v915 = vunpack.c.l.s4 1983009808
    %v916 = vunpack.c.0.s8 %v915
    %v917 = vlaneseq
    %v918 = vshrl.u32 %v917, 7
    %v919 = vsub.s32 %v916, %v918
    %v920 = vrot.slane %v893, %v919
    %v922 = vunpack.c.l.s4 1983009808
    %v923 = vunpack.c.0.s8 %v922
    %v924 = vlaneseq
    %v925 = vshrl.u32 %v924, 7
    %v926 = vsub.s32 %v923, %v925
    %v927 = vrot.slane %v913, %v926
    %v928 = vcombine.high %v920, %v920
    %v929 = vcombine.high %v927, %v927
    %v938 = vpack.c.bf16 %v903, %v903
    %v939 = vpack.c.bf16 %v911, %v911
    %v940 = vpack.c.bf16 %v910, %v910
    %v941 = vpack.c.bf16 %v912, %v912
    %v942 = vpack.c.bf16 %v920, %v920
    %v943 = vpack.c.bf16 %v928, %v928
    %v944 = vpack.c.bf16 %v927, %v927
    %v945 = vpack.c.bf16 %v929, %v929
    %946 = vmatprep.subr.bf16.mxu0 0
    %947 = vmatpush1.bf16.msra.mxu0 %v513
    %948 = vmatprep.subr.bf16.mxu0 0
    %949 = vmatpush1.bf16.msra.mxu0 %v512
    %950 = vmatprep.subr.bf16.mxu0 0
    %951 = vmatpush1.bf16.msra.mxu0 %v511
    %952 = vmatprep.subr.bf16.mxu0 0
    %953 = vmatpush1.bf16.msra.mxu0 %v510
    %954 = vmatprep.subr.bf16.mxu0 0
    %955 = vmatpush1.bf16.msra.mxu0 %v509
    %956 = vmatprep.subr.bf16.mxu0 0
    %957 = vmatpush1.bf16.msra.mxu0 %v508
    %958 = vmatprep.subr.bf16.mxu0 0
    %959 = vmatpush1.bf16.msra.mxu0 %v507
    %960 = vmatprep.subr.bf16.mxu0 0
    %961 = vmatpush1.bf16.msra.mxu0 %v506
    %962 = vmatprep.subr.bf16.mxu0 0
    %963 = vmatpush2.bf16.msra.mxu0 %v521
    %964 = vmatprep.subr.bf16.mxu0 0
    %965 = vmatpush2.bf16.msra.mxu0 %v520
    %966 = vmatprep.subr.bf16.mxu0 0
    %967 = vmatpush2.bf16.msra.mxu0 %v519
    %968 = vmatprep.subr.bf16.mxu0 0
    %969 = vmatpush2.bf16.msra.mxu0 %v518
    %970 = vmatprep.subr.bf16.mxu0 0
    %971 = vmatpush2.bf16.msra.mxu0 %v517
    %972 = vmatprep.subr.bf16.mxu0 0
    %973 = vmatpush2.bf16.msra.mxu0 %v516
    %974 = vmatprep.subr.bf16.mxu0 0
    %975 = vmatpush2.bf16.msra.mxu0 %v515
    %976 = vmatprep.subr.bf16.mxu0 0
    %977 = vmatpush2.bf16.msra.mxu0 %v514
    %978 = vmatprep.mubr.bf16.mxu0 %v939
    %979 = vmatmul.mubr.bf16.gmra.mxu0 %v938
    %v980 = vpop.f32.mrf.mxu0
    %v981 = vadd.f32 %v248, %v980
    %v982 = vpop.f32.mrf.mxu0
    %v983 = vpop.f32.mrf.mxu0
    %v984 = vpop.f32.mrf.mxu0
    %985 = vdwg.mxu0
    %986 = vmatprep.subr.bf16.mxu0 0
    %987 = vmatpush1.bf16.msra.mxu0 %v529
    %988 = vmatprep.subr.bf16.mxu0 0
    %989 = vmatpush1.bf16.msra.mxu0 %v528
    %990 = vmatprep.subr.bf16.mxu0 0
    %991 = vmatpush1.bf16.msra.mxu0 %v527
    %992 = vmatprep.subr.bf16.mxu0 0
    %993 = vmatpush1.bf16.msra.mxu0 %v526
    %994 = vmatprep.subr.bf16.mxu0 0
    %995 = vmatpush1.bf16.msra.mxu0 %v525
    %996 = vmatprep.subr.bf16.mxu0 0
    %997 = vmatpush1.bf16.msra.mxu0 %v524
    %998 = vmatprep.subr.bf16.mxu0 0
    %999 = vmatpush1.bf16.msra.mxu0 %v523
    %1000 = vmatprep.subr.bf16.mxu0 0
    %1001 = vmatpush1.bf16.msra.mxu0 %v522
    %1002 = vmatprep.subr.bf16.mxu0 0
    %1003 = vmatpush2.bf16.msra.mxu0 %v537
    %1004 = vmatprep.subr.bf16.mxu0 0
    %1005 = vmatpush2.bf16.msra.mxu0 %v536
    %1006 = vmatprep.subr.bf16.mxu0 0
    %1007 = vmatpush2.bf16.msra.mxu0 %v535
    %1008 = vmatprep.subr.bf16.mxu0 0
    %1009 = vmatpush2.bf16.msra.mxu0 %v534
    %1010 = vmatprep.subr.bf16.mxu0 0
    %1011 = vmatpush2.bf16.msra.mxu0 %v533
    %1012 = vmatprep.subr.bf16.mxu0 0
    %1013 = vmatpush2.bf16.msra.mxu0 %v532
    %1014 = vmatprep.subr.bf16.mxu0 0
    %1015 = vmatpush2.bf16.msra.mxu0 %v531
    %1016 = vmatprep.subr.bf16.mxu0 0
    %1017 = vmatpush2.bf16.msra.mxu0 %v530
    %1018 = vmatprep.mubr.bf16.mxu0 %v941
    %1019 = vmatmul.mubr.bf16.gmra.mxu0 %v940
    %v1020 = vpop.f32.mrf.mxu0
    %v1021 = vadd.f32 %v981, %v1020
    %v1022 = vpop.f32.mrf.mxu0
    %v1023 = vpop.f32.mrf.mxu0
    %v1024 = vpop.f32.mrf.mxu0
    %1025 = vdwg.mxu0
    %1026 = vmatprep.subr.bf16.mxu0 0
    %1027 = vmatpush1.bf16.msra.mxu0 %v545
    %1028 = vmatprep.subr.bf16.mxu0 0
    %1029 = vmatpush1.bf16.msra.mxu0 %v544
    %1030 = vmatprep.subr.bf16.mxu0 0
    %1031 = vmatpush1.bf16.msra.mxu0 %v543
    %1032 = vmatprep.subr.bf16.mxu0 0
    %1033 = vmatpush1.bf16.msra.mxu0 %v542
    %1034 = vmatprep.subr.bf16.mxu0 0
    %1035 = vmatpush1.bf16.msra.mxu0 %v541
    %1036 = vmatprep.subr.bf16.mxu0 0
    %1037 = vmatpush1.bf16.msra.mxu0 %v540
    %1038 = vmatprep.subr.bf16.mxu0 0
    %1039 = vmatpush1.bf16.msra.mxu0 %v539
    %1040 = vmatprep.subr.bf16.mxu0 0
    %1041 = vmatpush1.bf16.msra.mxu0 %v538
    %1042 = vmatprep.subr.bf16.mxu0 0
    %1043 = vmatpush2.bf16.msra.mxu0 %v553
    %1044 = vmatprep.subr.bf16.mxu0 0
    %1045 = vmatpush2.bf16.msra.mxu0 %v552
    %1046 = vmatprep.subr.bf16.mxu0 0
    %1047 = vmatpush2.bf16.msra.mxu0 %v551
    %1048 = vmatprep.subr.bf16.mxu0 0
    %1049 = vmatpush2.bf16.msra.mxu0 %v550
    %1050 = vmatprep.subr.bf16.mxu0 0
    %1051 = vmatpush2.bf16.msra.mxu0 %v549
    %1052 = vmatprep.subr.bf16.mxu0 0
    %1053 = vmatpush2.bf16.msra.mxu0 %v548
    %1054 = vmatprep.subr.bf16.mxu0 0
    %1055 = vmatpush2.bf16.msra.mxu0 %v547
    %1056 = vmatprep.subr.bf16.mxu0 0
    %1057 = vmatpush2.bf16.msra.mxu0 %v546
    %1058 = vmatprep.mubr.bf16.mxu0 %v943
    %1059 = vmatmul.mubr.bf16.gmra.mxu0 %v942
    %v1060 = vpop.f32.mrf.mxu0
    %v1061 = vadd.f32 %v1021, %v1060
    %v1062 = vpop.f32.mrf.mxu0
    %v1063 = vpop.f32.mrf.mxu0
    %v1064 = vpop.f32.mrf.mxu0
    %1065 = vdwg.mxu0
    %1066 = vmatprep.subr.bf16.mxu0 0
    %1067 = vmatpush1.bf16.msra.mxu0 %v561
    %1068 = vmatprep.subr.bf16.mxu0 0
    %1069 = vmatpush1.bf16.msra.mxu0 %v560
    %1070 = vmatprep.subr.bf16.mxu0 0
    %1071 = vmatpush1.bf16.msra.mxu0 %v559
    %1072 = vmatprep.subr.bf16.mxu0 0
    %1073 = vmatpush1.bf16.msra.mxu0 %v558
    %1074 = vmatprep.subr.bf16.mxu0 0
    %1075 = vmatpush1.bf16.msra.mxu0 %v557
    %1076 = vmatprep.subr.bf16.mxu0 0
    %1077 = vmatpush1.bf16.msra.mxu0 %v556
    %1078 = vmatprep.subr.bf16.mxu0 0
    %1079 = vmatpush1.bf16.msra.mxu0 %v555
    %1080 = vmatprep.subr.bf16.mxu0 0
    %1081 = vmatpush1.bf16.msra.mxu0 %v554
    %1082 = vmatprep.subr.bf16.mxu0 0
    %1083 = vmatpush2.bf16.msra.mxu0 %v569
    %1084 = vmatprep.subr.bf16.mxu0 0
    %1085 = vmatpush2.bf16.msra.mxu0 %v568
    %1086 = vmatprep.subr.bf16.mxu0 0
    %1087 = vmatpush2.bf16.msra.mxu0 %v567
    %1088 = vmatprep.subr.bf16.mxu0 0
    %1089 = vmatpush2.bf16.msra.mxu0 %v566
    %1090 = vmatprep.subr.bf16.mxu0 0
    %1091 = vmatpush2.bf16.msra.mxu0 %v565
    %1092 = vmatprep.subr.bf16.mxu0 0
    %1093 = vmatpush2.bf16.msra.mxu0 %v564
    %1094 = vmatprep.subr.bf16.mxu0 0
    %1095 = vmatpush2.bf16.msra.mxu0 %v563
    %1096 = vmatprep.subr.bf16.mxu0 0
    %1097 = vmatpush2.bf16.msra.mxu0 %v562
    %1098 = vmatprep.mubr.bf16.mxu0 %v945
    %1099 = vmatmul.mubr.bf16.gmra.mxu0 %v944
    %v1100 = vpop.f32.mrf.mxu0
    %v1101 = vadd.f32 %v1061, %v1100
    %v1102 = vpop.f32.mrf.mxu0
    %v1103 = vpop.f32.mrf.mxu0
    %v1104 = vpop.f32.mrf.mxu0
    %1105 = vdwg.mxu0
    %v1106 = vmax.f32 %v1101, 0.0
    %v1107 = vpack.c.bf16 %v1106, %v1106
    %1108 = vmatprep.subr.bf16.mxu0 0
    %1109 = vmatpush1.bf16.msra.mxu0 %v841
    %1110 = vmatprep.subr.bf16.mxu0 0
    %1111 = vmatpush1.bf16.msra.mxu0 %v840
    %1112 = vmatprep.subr.bf16.mxu0 0
    %1113 = vmatpush1.bf16.msra.mxu0 %v839
    %1114 = vmatprep.subr.bf16.mxu0 0
    %1115 = vmatpush1.bf16.msra.mxu0 %v838
    %1116 = vmatprep.subr.bf16.mxu0 0
    %1117 = vmatpush1.bf16.msra.mxu0 %v837
    %1118 = vmatprep.subr.bf16.mxu0 0
    %1119 = vmatpush1.bf16.msra.mxu0 %v836
    %1120 = vmatprep.subr.bf16.mxu0 0
    %1121 = vmatpush1.bf16.msra.mxu0 %v835
    %1122 = vmatprep.subr.bf16.mxu0 0
    %1123 = vmatpush1.bf16.msra.mxu0 %v834
    %1124 = vmatprep.subr.bf16.mxu0 0
    %1125 = vmatpush2.bf16.msra.mxu0 0
    %1126 = vmatprep.subr.bf16.mxu0 0
    %1127 = vmatpush2.bf16.msra.mxu0 0
    %1128 = vmatprep.subr.bf16.mxu0 0
    %1129 = vmatpush2.bf16.msra.mxu0 0
    %1130 = vmatprep.subr.bf16.mxu0 0
    %1131 = vmatpush2.bf16.msra.mxu0 0
    %1132 = vmatprep.subr.bf16.mxu0 0
    %1133 = vmatpush2.bf16.msra.mxu0 0
    %1134 = vmatprep.subr.bf16.mxu0 0
    %1135 = vmatpush2.bf16.msra.mxu0 0
    %1136 = vmatprep.subr.bf16.mxu0 0
    %1137 = vmatpush2.bf16.msra.mxu0 0
    %1138 = vmatprep.subr.bf16.mxu0 0
    %1139 = vmatpush2.bf16.msra.mxu0 0
    %1140 = vmatprep.mubr.bf16.mxu0 0
    %1141 = vmatmul.mubr.bf16.gmra.mxu0 %v1107
    %v1142 = vpop.f32.mrf.mxu0
    %v1143 = vadd.f32 %v800, %v1142
    %v1144 = vpop.f32.mrf.mxu0
    %v1145 = vpop.f32.mrf.mxu0
    %v1146 = vpop.f32.mrf.mxu0
    %1147 = vdwg.mxu0
    %v1148 = vpack.c.bf16 %v1143, %v1143
    %1149 = vst [vmem:[%s8] sm:$0x1] %v1148
    %v1150 = vld [vmem:[%s2] sm:$0xff]
    %v1151 = vld [vmem:[%s2 + $0x8] sm:$0xff]
    %v1154 = vcombine.high %v1150, %v1150
    %v1156 = vunpack.c.l.s4 1983009808
    %v1157 = vunpack.c.0.s8 %v1156
    %v1158 = vlaneseq
    %v1159 = vshrl.u32 %v1158, 7
    %v1160 = vsub.s32 %v1157, %v1159
    %v1161 = vrot.slane %v1150, %v1160
    %v1163 = vunpack.c.l.s4 1983009808
    %v1164 = vunpack.c.0.s8 %v1163
    %v1165 = vlaneseq
    %v1166 = vshrl.u32 %v1165, 7
    %v1167 = vsub.s32 %v1164, %v1166
    %v1168 = vrot.slane %v1154, %v1167
    %v1169 = vcombine.high %v1161, %v1161
    %v1170 = vcombine.high %v1168, %v1168
    %v1171 = vcombine.high %v1151, %v1151
    %v1173 = vunpack.c.l.s4 1983009808
    %v1174 = vunpack.c.0.s8 %v1173
    %v1175 = vlaneseq
    %v1176 = vshrl.u32 %v1175, 7
    %v1177 = vsub.s32 %v1174, %v1176
    %v1178 = vrot.slane %v1151, %v1177
    %v1180 = vunpack.c.l.s4 1983009808
    %v1181 = vunpack.c.0.s8 %v1180
    %v1182 = vlaneseq
    %v1183 = vshrl.u32 %v1182, 7
    %v1184 = vsub.s32 %v1181, %v1183
    %v1185 = vrot.slane %v1171, %v1184
    %v1186 = vcombine.high %v1178, %v1178
    %v1187 = vcombine.high %v1185, %v1185
    %v1196 = vpack.c.bf16 %v1161, %v1161
    %v1197 = vpack.c.bf16 %v1169, %v1169
    %v1198 = vpack.c.bf16 %v1168, %v1168
    %v1199 = vpack.c.bf16 %v1170, %v1170
    %v1200 = vpack.c.bf16 %v1178, %v1178
    %v1201 = vpack.c.bf16 %v1186, %v1186
    %v1202 = vpack.c.bf16 %v1185, %v1185
    %v1203 = vpack.c.bf16 %v1187, %v1187
    %1204 = vmatprep.subr.bf16.mxu0 0
    %1205 = vmatpush1.bf16.msra.mxu0 %v513
    %1206 = vmatprep.subr.bf16.mxu0 0
    %1207 = vmatpush1.bf16.msra.mxu0 %v512
    %1208 = vmatprep.subr.bf16.mxu0 0
    %1209 = vmatpush1.bf16.msra.mxu0 %v511
    %1210 = vmatprep.subr.bf16.mxu0 0
    %1211 = vmatpush1.bf16.msra.mxu0 %v510
    %1212 = vmatprep.subr.bf16.mxu0 0
    %1213 = vmatpush1.bf16.msra.mxu0 %v509
    %1214 = vmatprep.subr.bf16.mxu0 0
    %1215 = vmatpush1.bf16.msra.mxu0 %v508
    %1216 = vmatprep.subr.bf16.mxu0 0
    %1217 = vmatpush1.bf16.msra.mxu0 %v507
    %1218 = vmatprep.subr.bf16.mxu0 0
    %1219 = vmatpush1.bf16.msra.mxu0 %v506
    %1220 = vmatprep.subr.bf16.mxu0 0
    %1221 = vmatpush2.bf16.msra.mxu0 %v521
    %1222 = vmatprep.subr.bf16.mxu0 0
    %1223 = vmatpush2.bf16.msra.mxu0 %v520
    %1224 = vmatprep.subr.bf16.mxu0 0
    %1225 = vmatpush2.bf16.msra.mxu0 %v519
    %1226 = vmatprep.subr.bf16.mxu0 0
    %1227 = vmatpush2.bf16.msra.mxu0 %v518
    %1228 = vmatprep.subr.bf16.mxu0 0
    %1229 = vmatpush2.bf16.msra.mxu0 %v517
    %1230 = vmatprep.subr.bf16.mxu0 0
    %1231 = vmatpush2.bf16.msra.mxu0 %v516
    %1232 = vmatprep.subr.bf16.mxu0 0
    %1233 = vmatpush2.bf16.msra.mxu0 %v515
    %1234 = vmatprep.subr.bf16.mxu0 0
    %1235 = vmatpush2.bf16.msra.mxu0 %v514
    %1236 = vmatprep.mubr.bf16.mxu0 %v1197
    %1237 = vmatmul.mubr.bf16.gmra.mxu0 %v1196
    %v1238 = vpop.f32.mrf.mxu0
    %v1239 = vadd.f32 %v248, %v1238
    %v1240 = vpop.f32.mrf.mxu0
    %v1241 = vpop.f32.mrf.mxu0
    %v1242 = vpop.f32.mrf.mxu0
    %1243 = vdwg.mxu0
    %1244 = vmatprep.subr.bf16.mxu0 0
    %1245 = vmatpush1.bf16.msra.mxu0 %v529
    %1246 = vmatprep.subr.bf16.mxu0 0
    %1247 = vmatpush1.bf16.msra.mxu0 %v528
    %1248 = vmatprep.subr.bf16.mxu0 0
    %1249 = vmatpush1.bf16.msra.mxu0 %v527
    %1250 = vmatprep.subr.bf16.mxu0 0
    %1251 = vmatpush1.bf16.msra.mxu0 %v526
    %1252 = vmatprep.subr.bf16.mxu0 0
    %1253 = vmatpush1.bf16.msra.mxu0 %v525
    %1254 = vmatprep.subr.bf16.mxu0 0
    %1255 = vmatpush1.bf16.msra.mxu0 %v524
    %1256 = vmatprep.subr.bf16.mxu0 0
    %1257 = vmatpush1.bf16.msra.mxu0 %v523
    %1258 = vmatprep.subr.bf16.mxu0 0
    %1259 = vmatpush1.bf16.msra.mxu0 %v522
    %1260 = vmatprep.subr.bf16.mxu0 0
    %1261 = vmatpush2.bf16.msra.mxu0 %v537
    %1262 = vmatprep.subr.bf16.mxu0 0
    %1263 = vmatpush2.bf16.msra.mxu0 %v536
    %1264 = vmatprep.subr.bf16.mxu0 0
    %1265 = vmatpush2.bf16.msra.mxu0 %v535
    %1266 = vmatprep.subr.bf16.mxu0 0
    %1267 = vmatpush2.bf16.msra.mxu0 %v534
    %1268 = vmatprep.subr.bf16.mxu0 0
    %1269 = vmatpush2.bf16.msra.mxu0 %v533
    %1270 = vmatprep.subr.bf16.mxu0 0
    %1271 = vmatpush2.bf16.msra.mxu0 %v532
    %1272 = vmatprep.subr.bf16.mxu0 0
    %1273 = vmatpush2.bf16.msra.mxu0 %v531
    %1274 = vmatprep.subr.bf16.mxu0 0
    %1275 = vmatpush2.bf16.msra.mxu0 %v530
    %1276 = vmatprep.mubr.bf16.mxu0 %v1199
    %1277 = vmatmul.mubr.bf16.gmra.mxu0 %v1198
    %v1278 = vpop.f32.mrf.mxu0
    %v1279 = vadd.f32 %v1239, %v1278
    %v1280 = vpop.f32.mrf.mxu0
    %v1281 = vpop.f32.mrf.mxu0
    %v1282 = vpop.f32.mrf.mxu0
    %1283 = vdwg.mxu0
    %1284 = vmatprep.subr.bf16.mxu0 0
    %1285 = vmatpush1.bf16.msra.mxu0 %v545
    %1286 = vmatprep.subr.bf16.mxu0 0
    %1287 = vmatpush1.bf16.msra.mxu0 %v544
    %1288 = vmatprep.subr.bf16.mxu0 0
    %1289 = vmatpush1.bf16.msra.mxu0 %v543
    %1290 = vmatprep.subr.bf16.mxu0 0
    %1291 = vmatpush1.bf16.msra.mxu0 %v542
    %1292 = vmatprep.subr.bf16.mxu0 0
    %1293 = vmatpush1.bf16.msra.mxu0 %v541
    %1294 = vmatprep.subr.bf16.mxu0 0
    %1295 = vmatpush1.bf16.msra.mxu0 %v540
    %1296 = vmatprep.subr.bf16.mxu0 0
    %1297 = vmatpush1.bf16.msra.mxu0 %v539
    %1298 = vmatprep.subr.bf16.mxu0 0
    %1299 = vmatpush1.bf16.msra.mxu0 %v538
    %1300 = vmatprep.subr.bf16.mxu0 0
    %1301 = vmatpush2.bf16.msra.mxu0 %v553
    %1302 = vmatprep.subr.bf16.mxu0 0
    %1303 = vmatpush2.bf16.msra.mxu0 %v552
    %1304 = vmatprep.subr.bf16.mxu0 0
    %1305 = vmatpush2.bf16.msra.mxu0 %v551
    %1306 = vmatprep.subr.bf16.mxu0 0
    %1307 = vmatpush2.bf16.msra.mxu0 %v550
    %1308 = vmatprep.subr.bf16.mxu0 0
    %1309 = vmatpush2.bf16.msra.mxu0 %v549
    %1310 = vmatprep.subr.bf16.mxu0 0
    %1311 = vmatpush2.bf16.msra.mxu0 %v548
    %1312 = vmatprep.subr.bf16.mxu0 0
    %1313 = vmatpush2.bf16.msra.mxu0 %v547
    %1314 = vmatprep.subr.bf16.mxu0 0
    %1315 = vmatpush2.bf16.msra.mxu0 %v546
    %1316 = vmatprep.mubr.bf16.mxu0 %v1201
    %1317 = vmatmul.mubr.bf16.gmra.mxu0 %v1200
    %v1318 = vpop.f32.mrf.mxu0
    %v1319 = vadd.f32 %v1279, %v1318
    %v1320 = vpop.f32.mrf.mxu0
    %v1321 = vpop.f32.mrf.mxu0
    %v1322 = vpop.f32.mrf.mxu0
    %1323 = vdwg.mxu0
    %1324 = vmatprep.subr.bf16.mxu0 0
    %1325 = vmatpush1.bf16.msra.mxu0 %v561
    %1326 = vmatprep.subr.bf16.mxu0 0
    %1327 = vmatpush1.bf16.msra.mxu0 %v560
    %1328 = vmatprep.subr.bf16.mxu0 0
    %1329 = vmatpush1.bf16.msra.mxu0 %v559
    %1330 = vmatprep.subr.bf16.mxu0 0
    %1331 = vmatpush1.bf16.msra.mxu0 %v558
    %1332 = vmatprep.subr.bf16.mxu0 0
    %1333 = vmatpush1.bf16.msra.mxu0 %v557
    %1334 = vmatprep.subr.bf16.mxu0 0
    %1335 = vmatpush1.bf16.msra.mxu0 %v556
    %1336 = vmatprep.subr.bf16.mxu0 0
    %1337 = vmatpush1.bf16.msra.mxu0 %v555
    %1338 = vmatprep.subr.bf16.mxu0 0
    %1339 = vmatpush1.bf16.msra.mxu0 %v554
    %1340 = vmatprep.subr.bf16.mxu0 0
    %1341 = vmatpush2.bf16.msra.mxu0 %v569
    %1342 = vmatprep.subr.bf16.mxu0 0
    %1343 = vmatpush2.bf16.msra.mxu0 %v568
    %1344 = vmatprep.subr.bf16.mxu0 0
    %1345 = vmatpush2.bf16.msra.mxu0 %v567
    %1346 = vmatprep.subr.bf16.mxu0 0
    %1347 = vmatpush2.bf16.msra.mxu0 %v566
    %1348 = vmatprep.subr.bf16.mxu0 0
    %1349 = vmatpush2.bf16.msra.mxu0 %v565
    %1350 = vmatprep.subr.bf16.mxu0 0
    %1351 = vmatpush2.bf16.msra.mxu0 %v564
    %1352 = vmatprep.subr.bf16.mxu0 0
    %1353 = vmatpush2.bf16.msra.mxu0 %v563
    %1354 = vmatprep.subr.bf16.mxu0 0
    %1355 = vmatpush2.bf16.msra.mxu0 %v562
    %1356 = vmatprep.mubr.bf16.mxu0 %v1203
    %1357 = vmatmul.mubr.bf16.gmra.mxu0 %v1202
    %v1358 = vpop.f32.mrf.mxu0
    %v1359 = vadd.f32 %v1319, %v1358
    %v1360 = vpop.f32.mrf.mxu0
    %v1361 = vpop.f32.mrf.mxu0
    %v1362 = vpop.f32.mrf.mxu0
    %1363 = vdwg.mxu0
    %v1364 = vmax.f32 %v1359, 0.0
    %v1365 = vpack.c.bf16 %v1364, %v1364
    %1366 = vmatprep.subr.bf16.mxu0 0
    %1367 = vmatpush1.bf16.msra.mxu0 %v841
    %1368 = vmatprep.subr.bf16.mxu0 0
    %1369 = vmatpush1.bf16.msra.mxu0 %v840
    %1370 = vmatprep.subr.bf16.mxu0 0
    %1371 = vmatpush1.bf16.msra.mxu0 %v839
    %1372 = vmatprep.subr.bf16.mxu0 0
    %1373 = vmatpush1.bf16.msra.mxu0 %v838
    %1374 = vmatprep.subr.bf16.mxu0 0
    %1375 = vmatpush1.bf16.msra.mxu0 %v837
    %1376 = vmatprep.subr.bf16.mxu0 0
    %1377 = vmatpush1.bf16.msra.mxu0 %v836
    %1378 = vmatprep.subr.bf16.mxu0 0
    %1379 = vmatpush1.bf16.msra.mxu0 %v835
    %1380 = vmatprep.subr.bf16.mxu0 0
    %1381 = vmatpush1.bf16.msra.mxu0 %v834
    %1382 = vmatprep.subr.bf16.mxu0 0
    %1383 = vmatpush2.bf16.msra.mxu0 0
    %1384 = vmatprep.subr.bf16.mxu0 0
    %1385 = vmatpush2.bf16.msra.mxu0 0
    %1386 = vmatprep.subr.bf16.mxu0 0
    %1387 = vmatpush2.bf16.msra.mxu0 0
    %1388 = vmatprep.subr.bf16.mxu0 0
    %1389 = vmatpush2.bf16.msra.mxu0 0
    %1390 = vmatprep.subr.bf16.mxu0 0
    %1391 = vmatpush2.bf16.msra.mxu0 0
    %1392 = vmatprep.subr.bf16.mxu0 0
    %1393 = vmatpush2.bf16.msra.mxu0 0
    %1394 = vmatprep.subr.bf16.mxu0 0
    %1395 = vmatpush2.bf16.msra.mxu0 0
    %1396 = vmatprep.subr.bf16.mxu0 0
    %1397 = vmatpush2.bf16.msra.mxu0 0
    %1398 = vmatprep.mubr.bf16.mxu0 0
    %1399 = vmatmul.mubr.bf16.gmra.mxu0 %v1365
    %v1400 = vpop.f32.mrf.mxu0
    %v1401 = vadd.f32 %v800, %v1400
    %v1402 = vpop.f32.mrf.mxu0
    %v1403 = vpop.f32.mrf.mxu0
    %v1404 = vpop.f32.mrf.mxu0
    %1405 = vdwg.mxu0
    %v1406 = vpack.c.bf16 %v1401, %v1401
    %1407 = vst [vmem:[%s9] sm:$0x1] %v1406
    // Predicated region
    $region34: #{_lambda_.1} parent=1 // pred_check
      _
    $region35: #{_lambda_.1} parent=1 // pred_check_branch
      %1409 = sbr.rel (0) target = $region37
    $region36: #{_lambda_.1} parent=1 // pred_region
      _
    $region37: #{_lambda_.1} parent=1 // pred_fallthru
      _
    // Predicated region
    $region38: #{_lambda_.1} parent=1 // pred_check
      _
    $region39: #{_lambda_.1} parent=1 // pred_check_branch
      %1411 = sbr.rel (0) target = $region41
    $region40: #{_lambda_.1} parent=1 // pred_region
      _
    $region41: #{_lambda_.1} parent=1 // pred_fallthru
      _
    // Predicated region
    $region42: #{_lambda_.1} parent=1 // pred_check
      _
    $region43: #{_lambda_.1} parent=1 // pred_check_branch
      %1413 = sbr.rel (0) target = $region45
    $region44: #{_lambda_.1} parent=1 // pred_region
      _
    $region45: #{_lambda_.1} parent=1 // pred_fallthru
      _
    // Predicated region
    $region46: #{_lambda_.1} parent=1 // pred_check
      _
    $region47: #{_lambda_.1} parent=1 // pred_check_branch
      %1415 = sbr.rel (0) target = $region49
    $region48: #{_lambda_.1} parent=1 // pred_region
      _
    $region49: #{_lambda_.1} parent=1 // pred_fallthru
      _
    // Predicated region
    $region50: #{_lambda_.1} parent=1 // pred_check
      _
    $region51: #{_lambda_.1} parent=1 // pred_check_branch
      %1417 = sbr.rel (0) target = $region53
    $region52: #{_lambda_.1} parent=1 // pred_region
      _
    $region53: #{_lambda_.1} parent=1 // pred_fallthru
      _
    // Predicated region
    $region54: #{_lambda_.1} parent=1 // pred_check
      _
    $region55: #{_lambda_.1} parent=1 // pred_check_branch
      %1419 = sbr.rel (0) target = $region57
    $region56: #{_lambda_.1} parent=1 // pred_region
      _
    $region57: #{_lambda_.1} parent=1 // pred_fallthru
      _
    %1420 = vsyncpa [#allocation3], 1

</llo_original>
